<compile_context>
chip_gen: v5e
topology: v5e:2x2
jax: 0.10.0
libtpu: 0.0.40
codegen_flags: <defaults>
</compile_context>

<pallas_src>
import functools

import jax
import jax.numpy as jnp
from jax import lax
from jax.experimental import pallas as pl
from jax.experimental.pallas import tpu as pltpu

# -------------------- model dims (small, synthetic) --------------------
B = 2            # real batch
BP = 8           # batch padded to the f32 sublane minimum
S = 8            # sequence length
D = 32           # encoder hidden size (stand-in for deberta hidden_size)
H = 128          # hidden_size_lstm
VOCAB = 100
VOCAB_PAD = 128  # lane-aligned stand-in embedding table
N_OUT = 6


# ---------------- Pallas kernel: embed + biLSTM pooling + MLP head ----------------
def head_kernel(tok_ref, mask_ref, emb_ref,          # (S*BP,1) i32, (S*BP,1) f32, (VOCAB_PAD,D)
                wih_f_ref, whh_f_ref, b_f_ref,       # forward LSTM:  (D,4H), (H,4H), (1,4H)
                wih_b_ref, whh_b_ref, b_b_ref,       # backward LSTM: (D,4H), (H,4H), (1,4H)
                w1f_ref, w1b_ref, b1_ref,            # head linear split: (H,H), (H,H), (1,H)
                w2_ref, b2_ref,                      # linear2: (H,6), (1,6)
                out_ref):                            # (BP, 6)
    SB = tok_ref.shape[0]                            # S * BP, time-major rows (row = t*BP + b)

    # ---- fused embedding lookup (one-hot MXU gather) + attention mask ----
    tok = tok_ref[...]                                               # (SB, 1) int32
    vocab_iota = lax.broadcasted_iota(jnp.int32, (SB, VOCAB_PAD), 1)
    one_hot = (vocab_iota == tok).astype(jnp.float32)                # (SB, VOCAB_PAD)
    x = jnp.dot(one_hot, emb_ref[...], preferred_element_type=jnp.float32)  # (SB, D)
    x = x * mask_ref[...]                                            # mask broadcast over D

    # ---- hoisted input projection for the forward direction ----
    # One (SB,D)x(D,4H) matmul; removes x@Wih and the bias add from the
    # serial h->h dependency chain.
    gx_f = jnp.dot(x, wih_f_ref[...], preferred_element_type=jnp.float32) + b_f_ref[...]

    # ---- backward direction: one step from the zero state on the last token,
    #      emitted before the forward recurrence so it hides under it ----
    x_last = x[(S - 1) * BP:, :]                                     # (BP, D), static slice
    g_b = jnp.dot(x_last, wih_b_ref[...], preferred_element_type=jnp.float32) + b_b_ref[...]
    i_b = jax.nn.sigmoid(g_b[:, 0:H])
    g_gate_b = jnp.tanh(g_b[:, 2 * H:3 * H])
    o_b = jax.nn.sigmoid(g_b[:, 3 * H:4 * H])
    c_b = i_b * g_gate_b                                             # f*c0 == 0
    h_bwd = o_b * jnp.tanh(c_b)
    head_bwd = jnp.dot(h_bwd, w1b_ref[...], preferred_element_type=jnp.float32)  # (BP, H)

    # ---- forward recurrence: only h @ Whh + gates on the serial path ----
    whh_f = whh_f_ref[...]
    h = jnp.zeros((BP, H), jnp.float32)
    c = jnp.zeros((BP, H), jnp.float32)
    for t in range(S):                                               # static, fully unrolled
        g = gx_f[t * BP:(t + 1) * BP, :] + jnp.dot(
            h, whh_f, preferred_element_type=jnp.float32)
        i_f = jax.nn.sigmoid(g[:, 0:2 * H])                          # i,f in one wide EUP slab
        g_gate = jnp.tanh(g[:, 2 * H:3 * H])
        o = jax.nn.sigmoid(g[:, 3 * H:4 * H])
        c = i_f[:, H:2 * H] * c + i_f[:, 0:H] * g_gate               # PyTorch i,f,g,o order
        h = o * jnp.tanh(c)

    # ---- MLP head: concat(h_fwd,h_bwd)@w1 + b1 -> ReLU -> @w2 + b2 (concat-free) ----
    hid = (jnp.dot(h, w1f_ref[...], preferred_element_type=jnp.float32)
           + head_bwd + b1_ref[...])
    hid = jnp.maximum(hid, 0.0)
    out = jnp.dot(hid, w2_ref[...], preferred_element_type=jnp.float32) + b2_ref[...]
    out_ref[...] = out.astype(out_ref.dtype)


def base_model_forward(tokens, mask, params):
    """tokens, mask: (B, S) int32 -> (B, 6) float32."""
    # TODO(synk): the pretrained microsoft/deberta-v3-base backbone has no Pallas
    # equivalent; a deterministic embedding lookup (fused into the kernel below)
    # stands in for deberta(tokens, mask).last_hidden_state.
    b_in, s_in = tokens.shape

    # Pad batch to the 8-row f32 sublane minimum and flatten time-major
    # (row index = t*BP + b) so the per-step slab is a contiguous aligned slice.
    tok_p = jnp.zeros((BP, s_in), jnp.int32).at[:b_in].set(tokens)
    msk_p = jnp.zeros((BP, s_in), jnp.float32).at[:b_in].set(mask.astype(jnp.float32))
    tok_tm = tok_p.T.reshape(s_in * BP, 1)
    msk_tm = msk_p.T.reshape(s_in * BP, 1)

    # Lane-aligned embedding table (extra rows never selected by the one-hot).
    emb_pad = jnp.zeros((VOCAB_PAD, D), jnp.float32).at[:VOCAB].set(params["emb"])

    # Split w1 so the backward half of the head can be computed early.
    w1f = params["w1"][:H, :]
    w1b = params["w1"][H:, :]

    vmem = functools.partial(pl.BlockSpec, memory_space=pltpu.MemorySpace.VMEM)
    args = (tok_tm, msk_tm, emb_pad,
            params["wih_f"], params["whh_f"], params["b_f"],
            params["wih_b"], params["whh_b"], params["b_b"],
            w1f, w1b, params["b1"],
            params["w2"], params["b2"])
    out_padded = pl.pallas_call(
        head_kernel,
        out_shape=jax.ShapeDtypeStruct((BP, N_OUT), jnp.float32),
        in_specs=[vmem() for _ in args],
        out_specs=vmem(),
    )(*args)
    # TODO(synk): for v7x / large batch, add a batch grid axis with
    # dimension_semantics=("parallel",) so both TensorCores are used; at B=2
    # the per-step grid overhead outweighs the benefit.
    return out_padded[:b_in]


# -------------------- parameter construction (deterministic) --------------------
def make_params(key):
    ks = jax.random.split(key, 12)
    bound = 1.0 / jnp.sqrt(H)   # PyTorch LSTM default init range

    def uni(k, shape):
        return jax.random.uniform(k, shape, jnp.float32, -bound, bound)

    # LSTM weights stored pre-transposed for x @ W layout; combined bias b_ih + b_hh.
    params = {
        "wih_f": uni(ks[0], (D, 4 * H)),
        "whh_f": uni(ks[1], (H, 4 * H)),
        "b_f":   uni(ks[2], (1, 4 * H)) + uni(ks[3], (1, 4 * H)),
        "wih_b": uni(ks[4], (D, 4 * H)),
        "whh_b": uni(ks[5], (H, 4 * H)),
        "b_b":   uni(ks[6], (1, 4 * H)) + uni(ks[7], (1, 4 * H)),
        # _init_weights: normal(mean=0, std=0.1) on the Linear weights
        "w1": 0.1 * jax.random.normal(ks[8], (2 * H, H), jnp.float32),
        "b1": jnp.zeros((1, H), jnp.float32),
        "w2": 0.1 * jax.random.normal(ks[9], (H, N_OUT), jnp.float32),
        "b2": jnp.zeros((1, N_OUT), jnp.float32),
        # stand-in encoder embedding table
        "emb": 0.02 * jax.random.normal(ks[10], (VOCAB, D), jnp.float32),
    }
    return params


if __name__ == "__main__":
    key = jax.random.PRNGKey(0)
    k_tok, k_param = jax.random.split(key)

    tokens = jax.random.randint(k_tok, (B, S), 0, VOCAB, dtype=jnp.int32)
    mask = jnp.ones((B, S), dtype=jnp.int32)

    params = make_params(k_param)
    out = base_model_forward(tokens, mask, params)
    out = jax.block_until_ready(out)

    assert out.shape == (B, N_OUT), out.shape
    assert jnp.all(jnp.isfinite(out))
    print("KERNEL_OK")
</pallas_src>

<mosaic_0001>
module attributes {stable_mosaic.version = 11 : i64} {
  func.func @head_kernel(%arg0: memref<64x1xi32, #tpu.memory_space<vmem>>, %arg1: memref<64x1xf32, #tpu.memory_space<vmem>>, %arg2: memref<128x32xf32, #tpu.memory_space<vmem>>, %arg3: memref<32x512xf32, #tpu.memory_space<vmem>>, %arg4: memref<128x512xf32, #tpu.memory_space<vmem>>, %arg5: memref<1x512xf32, #tpu.memory_space<vmem>>, %arg6: memref<32x512xf32, #tpu.memory_space<vmem>>, %arg7: memref<128x512xf32, #tpu.memory_space<vmem>>, %arg8: memref<1x512xf32, #tpu.memory_space<vmem>>, %arg9: memref<128x128xf32, #tpu.memory_space<vmem>>, %arg10: memref<128x128xf32, #tpu.memory_space<vmem>>, %arg11: memref<1x128xf32, #tpu.memory_space<vmem>>, %arg12: memref<128x6xf32, #tpu.memory_space<vmem>>, %arg13: memref<1x6xf32, #tpu.memory_space<vmem>>, %arg14: memref<8x6xf32, #tpu.memory_space<vmem>>) attributes {dimension_semantics = [], scalar_prefetch = 0 : i64, scratch_operands = 0 : i64, tpu.core_type = #tpu.core_type<tc>} {
    %c0 = arith.constant 0 : index
    %c0_0 = arith.constant 0 : index
    %0 = vector.load %arg0[%c0, %c0_0] : memref<64x1xi32, #tpu.memory_space<vmem>>, vector<64x1xi32>
    %1 = tpu.iota {dimensions = array<i32: 1>} : vector<64x128xi32>
    %2 = vector.broadcast %0 : vector<64x1xi32> to vector<64x128xi32>
    %3 = arith.cmpi eq, %1, %2 : vector<64x128xi32>
    %4 = arith.extui %3 : vector<64x128xi1> to vector<64x128xi32>
    %5 = arith.sitofp %4 : vector<64x128xi32> to vector<64x128xf32>
    %c0_1 = arith.constant 0 : index
    %c0_2 = arith.constant 0 : index
    %6 = vector.load %arg2[%c0_1, %c0_2] : memref<128x32xf32, #tpu.memory_space<vmem>>, vector<128x32xf32>
    %cst = arith.constant dense<0.000000e+00> : vector<64x32xf32>
    %7 = tpu.matmul %5, %6, %cst {dimension_numbers = #tpu.dot_dimension_numbers<[1], [0], [0], [1], [0, 0, 1, 1], [], []>} : vector<64x128xf32>, vector<128x32xf32>, vector<64x32xf32> -> vector<64x32xf32>
    %c0_3 = arith.constant 0 : index
    %c0_4 = arith.constant 0 : index
    %8 = vector.load %arg1[%c0_3, %c0_4] : memref<64x1xf32, #tpu.memory_space<vmem>>, vector<64x1xf32>
    %9 = vector.broadcast %8 : vector<64x1xf32> to vector<64x32xf32>
    %10 = arith.mulf %7, %9 : vector<64x32xf32>
    %c0_5 = arith.constant 0 : index
    %c0_6 = arith.constant 0 : index
    %11 = vector.load %arg3[%c0_5, %c0_6] : memref<32x512xf32, #tpu.memory_space<vmem>>, vector<32x512xf32>
    %cst_7 = arith.constant dense<0.000000e+00> : vector<64x512xf32>
    %12 = tpu.matmul %10, %11, %cst_7 {dimension_numbers = #tpu.dot_dimension_numbers<[1], [0], [0], [1], [0, 0, 1, 1], [], []>} : vector<64x32xf32>, vector<32x512xf32>, vector<64x512xf32> -> vector<64x512xf32>
    %c0_8 = arith.constant 0 : index
    %c0_9 = arith.constant 0 : index
    %13 = vector.load %arg5[%c0_8, %c0_9] : memref<1x512xf32, #tpu.memory_space<vmem>>, vector<1x512xf32>
    %14 = vector.broadcast %13 : vector<1x512xf32> to vector<64x512xf32>
    %15 = arith.addf %12, %14 : vector<64x512xf32>
    %16 = vector.extract_strided_slice %10 {offsets = [56, 0], sizes = [8, 32], strides = [1, 1]} : vector<64x32xf32> to vector<8x32xf32>
    %c0_10 = arith.constant 0 : index
    %c0_11 = arith.constant 0 : index
    %17 = vector.load %arg6[%c0_10, %c0_11] : memref<32x512xf32, #tpu.memory_space<vmem>>, vector<32x512xf32>
    %cst_12 = arith.constant dense<0.000000e+00> : vector<8x512xf32>
    %18 = tpu.matmul %16, %17, %cst_12 {dimension_numbers = #tpu.dot_dimension_numbers<[1], [0], [0], [1], [0, 0, 1, 1], [], []>} : vector<8x32xf32>, vector<32x512xf32>, vector<8x512xf32> -> vector<8x512xf32>
    %c0_13 = arith.constant 0 : index
    %c0_14 = arith.constant 0 : index
    %19 = vector.load %arg8[%c0_13, %c0_14] : memref<1x512xf32, #tpu.memory_space<vmem>>, vector<1x512xf32>
    %20 = vector.broadcast %19 : vector<1x512xf32> to vector<8x512xf32>
    %21 = arith.addf %18, %20 : vector<8x512xf32>
    %22 = vector.extract_strided_slice %21 {offsets = [0, 0], sizes = [8, 128], strides = [1, 1]} : vector<8x512xf32> to vector<8x128xf32>
    %23 = arith.negf %22 : vector<8x128xf32>
    %24 = math.exp %23 : vector<8x128xf32>
    %cst_15 = arith.constant 1.000000e+00 : f32
    %25 = vector.broadcast %cst_15 : f32 to vector<8x128xf32>
    %26 = arith.addf %25, %24 : vector<8x128xf32>
    %27 = arith.divf %25, %26 : vector<8x128xf32>
    %28 = vector.extract_strided_slice %21 {offsets = [0, 256], sizes = [8, 128], strides = [1, 1]} : vector<8x512xf32> to vector<8x128xf32>
    %29 = math.tanh %28 : vector<8x128xf32>
    %30 = vector.extract_strided_slice %21 {offsets = [0, 384], sizes = [8, 128], strides = [1, 1]} : vector<8x512xf32> to vector<8x128xf32>
    %31 = arith.negf %30 : vector<8x128xf32>
    %32 = math.exp %31 : vector<8x128xf32>
    %cst_16 = arith.constant 1.000000e+00 : f32
    %33 = vector.broadcast %cst_16 : f32 to vector<8x128xf32>
    %34 = arith.addf %33, %32 : vector<8x128xf32>
    %35 = arith.divf %33, %34 : vector<8x128xf32>
    %36 = arith.mulf %27, %29 : vector<8x128xf32>
    %37 = math.tanh %36 : vector<8x128xf32>
    %38 = arith.mulf %35, %37 : vector<8x128xf32>
    %c0_17 = arith.constant 0 : index
    %c0_18 = arith.constant 0 : index
    %39 = vector.load %arg10[%c0_17, %c0_18] : memref<128x128xf32, #tpu.memory_space<vmem>>, vector<128x128xf32>
    %cst_19 = arith.constant dense<0.000000e+00> : vector<8x128xf32>
    %40 = tpu.matmul %38, %39, %cst_19 {dimension_numbers = #tpu.dot_dimension_numbers<[1], [0], [0], [1], [0, 0, 1, 1], [], []>} : vector<8x128xf32>, vector<128x128xf32>, vector<8x128xf32> -> vector<8x128xf32>
    %c0_20 = arith.constant 0 : index
    %c0_21 = arith.constant 0 : index
    %41 = vector.load %arg4[%c0_20, %c0_21] : memref<128x512xf32, #tpu.memory_space<vmem>>, vector<128x512xf32>
    %cst_22 = arith.constant 0.000000e+00 : f32
    %42 = vector.broadcast %cst_22 : f32 to vector<8x128xf32>
    %cst_23 = arith.constant 0.000000e+00 : f32
    %43 = vector.broadcast %cst_23 : f32 to vector<8x128xf32>
    %44 = vector.extract_strided_slice %15 {offsets = [0, 0], sizes = [8, 512], strides = [1, 1]} : vector<64x512xf32> to vector<8x512xf32>
    %cst_24 = arith.constant dense<0.000000e+00> : vector<8x512xf32>
    %45 = tpu.matmul %42, %41, %cst_24 {dimension_numbers = #tpu.dot_dimension_numbers<[1], [0], [0], [1], [0, 0, 1, 1], [], []>} : vector<8x128xf32>, vector<128x512xf32>, vector<8x512xf32> -> vector<8x512xf32>
    %46 = arith.addf %44, %45 : vector<8x512xf32>
    %47 = vector.extract_strided_slice %46 {offsets = [0, 0], sizes = [8, 256], strides = [1, 1]} : vector<8x512xf32> to vector<8x256xf32>
    %48 = arith.negf %47 : vector<8x256xf32>
    %49 = math.exp %48 : vector<8x256xf32>
    %cst_25 = arith.constant 1.000000e+00 : f32
    %50 = vector.broadcast %cst_25 : f32 to vector<8x256xf32>
    %51 = arith.addf %50, %49 : vector<8x256xf32>
    %52 = arith.divf %50, %51 : vector<8x256xf32>
    %53 = vector.extract_strided_slice %46 {offsets = [0, 256], sizes = [8, 128], strides = [1, 1]} : vector<8x512xf32> to vector<8x128xf32>
    %54 = math.tanh %53 : vector<8x128xf32>
    %55 = vector.extract_strided_slice %46 {offsets = [0, 384], sizes = [8, 128], strides = [1, 1]} : vector<8x512xf32> to vector<8x128xf32>
    %56 = arith.negf %55 : vector<8x128xf32>
    %57 = math.exp %56 : vector<8x128xf32>
    %cst_26 = arith.constant 1.000000e+00 : f32
    %58 = vector.broadcast %cst_26 : f32 to vector<8x128xf32>
    %59 = arith.addf %58, %57 : vector<8x128xf32>
    %60 = arith.divf %58, %59 : vector<8x128xf32>
    %61 = vector.extract_strided_slice %52 {offsets = [0, 128], sizes = [8, 128], strides = [1, 1]} : vector<8x256xf32> to vector<8x128xf32>
    %62 = arith.mulf %61, %43 : vector<8x128xf32>
    %63 = vector.extract_strided_slice %52 {offsets = [0, 0], sizes = [8, 128], strides = [1, 1]} : vector<8x256xf32> to vector<8x128xf32>
    %64 = arith.mulf %63, %54 : vector<8x128xf32>
    %65 = arith.addf %62, %64 : vector<8x128xf32>
    %66 = math.tanh %65 : vector<8x128xf32>
    %67 = arith.mulf %60, %66 : vector<8x128xf32>
    %68 = vector.extract_strided_slice %15 {offsets = [8, 0], sizes = [8, 512], strides = [1, 1]} : vector<64x512xf32> to vector<8x512xf32>
    %cst_27 = arith.constant dense<0.000000e+00> : vector<8x512xf32>
    %69 = tpu.matmul %67, %41, %cst_27 {dimension_numbers = #tpu.dot_dimension_numbers<[1], [0], [0], [1], [0, 0, 1, 1], [], []>} : vector<8x128xf32>, vector<128x512xf32>, vector<8x512xf32> -> vector<8x512xf32>
    %70 = arith.addf %68, %69 : vector<8x512xf32>
    %71 = vector.extract_strided_slice %70 {offsets = [0, 0], sizes = [8, 256], strides = [1, 1]} : vector<8x512xf32> to vector<8x256xf32>
    %72 = arith.negf %71 : vector<8x256xf32>
    %73 = math.exp %72 : vector<8x256xf32>
    %cst_28 = arith.constant 1.000000e+00 : f32
    %74 = vector.broadcast %cst_28 : f32 to vector<8x256xf32>
    %75 = arith.addf %74, %73 : vector<8x256xf32>
    %76 = arith.divf %74, %75 : vector<8x256xf32>
    %77 = vector.extract_strided_slice %70 {offsets = [0, 256], sizes = [8, 128], strides = [1, 1]} : vector<8x512xf32> to vector<8x128xf32>
    %78 = math.tanh %77 : vector<8x128xf32>
    %79 = vector.extract_strided_slice %70 {offsets = [0, 384], sizes = [8, 128], strides = [1, 1]} : vector<8x512xf32> to vector<8x128xf32>
    %80 = arith.negf %79 : vector<8x128xf32>
    %81 = math.exp %80 : vector<8x128xf32>
    %cst_29 = arith.constant 1.000000e+00 : f32
    %82 = vector.broadcast %cst_29 : f32 to vector<8x128xf32>
    %83 = arith.addf %82, %81 : vector<8x128xf32>
    %84 = arith.divf %82, %83 : vector<8x128xf32>
    %85 = vector.extract_strided_slice %76 {offsets = [0, 128], sizes = [8, 128], strides = [1, 1]} : vector<8x256xf32> to vector<8x128xf32>
    %86 = arith.mulf %85, %65 : vector<8x128xf32>
    %87 = vector.extract_strided_slice %76 {offsets = [0, 0], sizes = [8, 128], strides = [1, 1]} : vector<8x256xf32> to vector<8x128xf32>
    %88 = arith.mulf %87, %78 : vector<8x128xf32>
    %89 = arith.addf %86, %88 : vector<8x128xf32>
    %90 = math.tanh %89 : vector<8x128xf32>
    %91 = arith.mulf %84, %90 : vector<8x128xf32>
    %92 = vector.extract_strided_slice %15 {offsets = [16, 0], sizes = [8, 512], strides = [1, 1]} : vector<64x512xf32> to vector<8x512xf32>
    %cst_30 = arith.constant dense<0.000000e+00> : vector<8x512xf32>
    %93 = tpu.matmul %91, %41, %cst_30 {dimension_numbers = #tpu.dot_dimension_numbers<[1], [0], [0], [1], [0, 0, 1, 1], [], []>} : vector<8x128xf32>, vector<128x512xf32>, vector<8x512xf32> -> vector<8x512xf32>
    %94 = arith.addf %92, %93 : vector<8x512xf32>
    %95 = vector.extract_strided_slice %94 {offsets = [0, 0], sizes = [8, 256], strides = [1, 1]} : vector<8x512xf32> to vector<8x256xf32>
    %96 = arith.negf %95 : vector<8x256xf32>
    %97 = math.exp %96 : vector<8x256xf32>
    %cst_31 = arith.constant 1.000000e+00 : f32
    %98 = vector.broadcast %cst_31 : f32 to vector<8x256xf32>
    %99 = arith.addf %98, %97 : vector<8x256xf32>
    %100 = arith.divf %98, %99 : vector<8x256xf32>
    %101 = vector.extract_strided_slice %94 {offsets = [0, 256], sizes = [8, 128], strides = [1, 1]} : vector<8x512xf32> to vector<8x128xf32>
    %102 = math.tanh %101 : vector<8x128xf32>
    %103 = vector.extract_strided_slice %94 {offsets = [0, 384], sizes = [8, 128], strides = [1, 1]} : vector<8x512xf32> to vector<8x128xf32>
    %104 = arith.negf %103 : vector<8x128xf32>
    %105 = math.exp %104 : vector<8x128xf32>
    %cst_32 = arith.constant 1.000000e+00 : f32
    %106 = vector.broadcast %cst_32 : f32 to vector<8x128xf32>
    %107 = arith.addf %106, %105 : vector<8x128xf32>
    %108 = arith.divf %106, %107 : vector<8x128xf32>
    %109 = vector.extract_strided_slice %100 {offsets = [0, 128], sizes = [8, 128], strides = [1, 1]} : vector<8x256xf32> to vector<8x128xf32>
    %110 = arith.mulf %109, %89 : vector<8x128xf32>
    %111 = vector.extract_strided_slice %100 {offsets = [0, 0], sizes = [8, 128], strides = [1, 1]} : vector<8x256xf32> to vector<8x128xf32>
    %112 = arith.mulf %111, %102 : vector<8x128xf32>
    %113 = arith.addf %110, %112 : vector<8x128xf32>
    %114 = math.tanh %113 : vector<8x128xf32>
    %115 = arith.mulf %108, %114 : vector<8x128xf32>
    %116 = vector.extract_strided_slice %15 {offsets = [24, 0], sizes = [8, 512], strides = [1, 1]} : vector<64x512xf32> to vector<8x512xf32>
    %cst_33 = arith.constant dense<0.000000e+00> : vector<8x512xf32>
    %117 = tpu.matmul %115, %41, %cst_33 {dimension_numbers = #tpu.dot_dimension_numbers<[1], [0], [0], [1], [0, 0, 1, 1], [], []>} : vector<8x128xf32>, vector<128x512xf32>, vector<8x512xf32> -> vector<8x512xf32>
    %118 = arith.addf %116, %117 : vector<8x512xf32>
    %119 = vector.extract_strided_slice %118 {offsets = [0, 0], sizes = [8, 256], strides = [1, 1]} : vector<8x512xf32> to vector<8x256xf32>
    %120 = arith.negf %119 : vector<8x256xf32>
    %121 = math.exp %120 : vector<8x256xf32>
    %cst_34 = arith.constant 1.000000e+00 : f32
    %122 = vector.broadcast %cst_34 : f32 to vector<8x256xf32>
    %123 = arith.addf %122, %121 : vector<8x256xf32>
    %124 = arith.divf %122, %123 : vector<8x256xf32>
    %125 = vector.extract_strided_slice %118 {offsets = [0, 256], sizes = [8, 128], strides = [1, 1]} : vector<8x512xf32> to vector<8x128xf32>
    %126 = math.tanh %125 : vector<8x128xf32>
    %127 = vector.extract_strided_slice %118 {offsets = [0, 384], sizes = [8, 128], strides = [1, 1]} : vector<8x512xf32> to vector<8x128xf32>
    %128 = arith.negf %127 : vector<8x128xf32>
    %129 = math.exp %128 : vector<8x128xf32>
    %cst_35 = arith.constant 1.000000e+00 : f32
    %130 = vector.broadcast %cst_35 : f32 to vector<8x128xf32>
    %131 = arith.addf %130, %129 : vector<8x128xf32>
    %132 = arith.divf %130, %131 : vector<8x128xf32>
    %133 = vector.extract_strided_slice %124 {offsets = [0, 128], sizes = [8, 128], strides = [1, 1]} : vector<8x256xf32> to vector<8x128xf32>
    %134 = arith.mulf %133, %113 : vector<8x128xf32>
    %135 = vector.extract_strided_slice %124 {offsets = [0, 0], sizes = [8, 128], strides = [1, 1]} : vector<8x256xf32> to vector<8x128xf32>
    %136 = arith.mulf %135, %126 : vector<8x128xf32>
    %137 = arith.addf %134, %136 : vector<8x128xf32>
    %138 = math.tanh %137 : vector<8x128xf32>
    %139 = arith.mulf %132, %138 : vector<8x128xf32>
    %140 = vector.extract_strided_slice %15 {offsets = [32, 0], sizes = [8, 512], strides = [1, 1]} : vector<64x512xf32> to vector<8x512xf32>
    %cst_36 = arith.constant dense<0.000000e+00> : vector<8x512xf32>
    %141 = tpu.matmul %139, %41, %cst_36 {dimension_numbers = #tpu.dot_dimension_numbers<[1], [0], [0], [1], [0, 0, 1, 1], [], []>} : vector<8x128xf32>, vector<128x512xf32>, vector<8x512xf32> -> vector<8x512xf32>
    %142 = arith.addf %140, %141 : vector<8x512xf32>
    %143 = vector.extract_strided_slice %142 {offsets = [0, 0], sizes = [8, 256], strides = [1, 1]} : vector<8x512xf32> to vector<8x256xf32>
    %144 = arith.negf %143 : vector<8x256xf32>
    %145 = math.exp %144 : vector<8x256xf32>
    %cst_37 = arith.constant 1.000000e+00 : f32
    %146 = vector.broadcast %cst_37 : f32 to vector<8x256xf32>
    %147 = arith.addf %146, %145 : vector<8x256xf32>
    %148 = arith.divf %146, %147 : vector<8x256xf32>
    %149 = vector.extract_strided_slice %142 {offsets = [0, 256], sizes = [8, 128], strides = [1, 1]} : vector<8x512xf32> to vector<8x128xf32>
    %150 = math.tanh %149 : vector<8x128xf32>
    %151 = vector.extract_strided_slice %142 {offsets = [0, 384], sizes = [8, 128], strides = [1, 1]} : vector<8x512xf32> to vector<8x128xf32>
    %152 = arith.negf %151 : vector<8x128xf32>
    %153 = math.exp %152 : vector<8x128xf32>
    %cst_38 = arith.constant 1.000000e+00 : f32
    %154 = vector.broadcast %cst_38 : f32 to vector<8x128xf32>
    %155 = arith.addf %154, %153 : vector<8x128xf32>
    %156 = arith.divf %154, %155 : vector<8x128xf32>
    %157 = vector.extract_strided_slice %148 {offsets = [0, 128], sizes = [8, 128], strides = [1, 1]} : vector<8x256xf32> to vector<8x128xf32>
    %158 = arith.mulf %157, %137 : vector<8x128xf32>
    %159 = vector.extract_strided_slice %148 {offsets = [0, 0], sizes = [8, 128], strides = [1, 1]} : vector<8x256xf32> to vector<8x128xf32>
    %160 = arith.mulf %159, %150 : vector<8x128xf32>
    %161 = arith.addf %158, %160 : vector<8x128xf32>
    %162 = math.tanh %161 : vector<8x128xf32>
    %163 = arith.mulf %156, %162 : vector<8x128xf32>
    %164 = vector.extract_strided_slice %15 {offsets = [40, 0], sizes = [8, 512], strides = [1, 1]} : vector<64x512xf32> to vector<8x512xf32>
    %cst_39 = arith.constant dense<0.000000e+00> : vector<8x512xf32>
    %165 = tpu.matmul %163, %41, %cst_39 {dimension_numbers = #tpu.dot_dimension_numbers<[1], [0], [0], [1], [0, 0, 1, 1], [], []>} : vector<8x128xf32>, vector<128x512xf32>, vector<8x512xf32> -> vector<8x512xf32>
    %166 = arith.addf %164, %165 : vector<8x512xf32>
    %167 = vector.extract_strided_slice %166 {offsets = [0, 0], sizes = [8, 256], strides = [1, 1]} : vector<8x512xf32> to vector<8x256xf32>
    %168 = arith.negf %167 : vector<8x256xf32>
    %169 = math.exp %168 : vector<8x256xf32>
    %cst_40 = arith.constant 1.000000e+00 : f32
    %170 = vector.broadcast %cst_40 : f32 to vector<8x256xf32>
    %171 = arith.addf %170, %169 : vector<8x256xf32>
    %172 = arith.divf %170, %171 : vector<8x256xf32>
    %173 = vector.extract_strided_slice %166 {offsets = [0, 256], sizes = [8, 128], strides = [1, 1]} : vector<8x512xf32> to vector<8x128xf32>
    %174 = math.tanh %173 : vector<8x128xf32>
    %175 = vector.extract_strided_slice %166 {offsets = [0, 384], sizes = [8, 128], strides = [1, 1]} : vector<8x512xf32> to vector<8x128xf32>
    %176 = arith.negf %175 : vector<8x128xf32>
    %177 = math.exp %176 : vector<8x128xf32>
    %cst_41 = arith.constant 1.000000e+00 : f32
    %178 = vector.broadcast %cst_41 : f32 to vector<8x128xf32>
    %179 = arith.addf %178, %177 : vector<8x128xf32>
    %180 = arith.divf %178, %179 : vector<8x128xf32>
    %181 = vector.extract_strided_slice %172 {offsets = [0, 128], sizes = [8, 128], strides = [1, 1]} : vector<8x256xf32> to vector<8x128xf32>
    %182 = arith.mulf %181, %161 : vector<8x128xf32>
    %183 = vector.extract_strided_slice %172 {offsets = [0, 0], sizes = [8, 128], strides = [1, 1]} : vector<8x256xf32> to vector<8x128xf32>
    %184 = arith.mulf %183, %174 : vector<8x128xf32>
    %185 = arith.addf %182, %184 : vector<8x128xf32>
    %186 = math.tanh %185 : vector<8x128xf32>
    %187 = arith.mulf %180, %186 : vector<8x128xf32>
    %188 = vector.extract_strided_slice %15 {offsets = [48, 0], sizes = [8, 512], strides = [1, 1]} : vector<64x512xf32> to vector<8x512xf32>
    %cst_42 = arith.constant dense<0.000000e+00> : vector<8x512xf32>
    %189 = tpu.matmul %187, %41, %cst_42 {dimension_numbers = #tpu.dot_dimension_numbers<[1], [0], [0], [1], [0, 0, 1, 1], [], []>} : vector<8x128xf32>, vector<128x512xf32>, vector<8x512xf32> -> vector<8x512xf32>
    %190 = arith.addf %188, %189 : vector<8x512xf32>
    %191 = vector.extract_strided_slice %190 {offsets = [0, 0], sizes = [8, 256], strides = [1, 1]} : vector<8x512xf32> to vector<8x256xf32>
    %192 = arith.negf %191 : vector<8x256xf32>
    %193 = math.exp %192 : vector<8x256xf32>
    %cst_43 = arith.constant 1.000000e+00 : f32
    %194 = vector.broadcast %cst_43 : f32 to vector<8x256xf32>
    %195 = arith.addf %194, %193 : vector<8x256xf32>
    %196 = arith.divf %194, %195 : vector<8x256xf32>
    %197 = vector.extract_strided_slice %190 {offsets = [0, 256], sizes = [8, 128], strides = [1, 1]} : vector<8x512xf32> to vector<8x128xf32>
    %198 = math.tanh %197 : vector<8x128xf32>
    %199 = vector.extract_strided_slice %190 {offsets = [0, 384], sizes = [8, 128], strides = [1, 1]} : vector<8x512xf32> to vector<8x128xf32>
    %200 = arith.negf %199 : vector<8x128xf32>
    %201 = math.exp %200 : vector<8x128xf32>
    %cst_44 = arith.constant 1.000000e+00 : f32
    %202 = vector.broadcast %cst_44 : f32 to vector<8x128xf32>
    %203 = arith.addf %202, %201 : vector<8x128xf32>
    %204 = arith.divf %202, %203 : vector<8x128xf32>
    %205 = vector.extract_strided_slice %196 {offsets = [0, 128], sizes = [8, 128], strides = [1, 1]} : vector<8x256xf32> to vector<8x128xf32>
    %206 = arith.mulf %205, %185 : vector<8x128xf32>
    %207 = vector.extract_strided_slice %196 {offsets = [0, 0], sizes = [8, 128], strides = [1, 1]} : vector<8x256xf32> to vector<8x128xf32>
    %208 = arith.mulf %207, %198 : vector<8x128xf32>
    %209 = arith.addf %206, %208 : vector<8x128xf32>
    %210 = math.tanh %209 : vector<8x128xf32>
    %211 = arith.mulf %204, %210 : vector<8x128xf32>
    %212 = vector.extract_strided_slice %15 {offsets = [56, 0], sizes = [8, 512], strides = [1, 1]} : vector<64x512xf32> to vector<8x512xf32>
    %cst_45 = arith.constant dense<0.000000e+00> : vector<8x512xf32>
    %213 = tpu.matmul %211, %41, %cst_45 {dimension_numbers = #tpu.dot_dimension_numbers<[1], [0], [0], [1], [0, 0, 1, 1], [], []>} : vector<8x128xf32>, vector<128x512xf32>, vector<8x512xf32> -> vector<8x512xf32>
    %214 = arith.addf %212, %213 : vector<8x512xf32>
    %215 = vector.extract_strided_slice %214 {offsets = [0, 0], sizes = [8, 256], strides = [1, 1]} : vector<8x512xf32> to vector<8x256xf32>
    %216 = arith.negf %215 : vector<8x256xf32>
    %217 = math.exp %216 : vector<8x256xf32>
    %cst_46 = arith.constant 1.000000e+00 : f32
    %218 = vector.broadcast %cst_46 : f32 to vector<8x256xf32>
    %219 = arith.addf %218, %217 : vector<8x256xf32>
    %220 = arith.divf %218, %219 : vector<8x256xf32>
    %221 = vector.extract_strided_slice %214 {offsets = [0, 256], sizes = [8, 128], strides = [1, 1]} : vector<8x512xf32> to vector<8x128xf32>
    %222 = math.tanh %221 : vector<8x128xf32>
    %223 = vector.extract_strided_slice %214 {offsets = [0, 384], sizes = [8, 128], strides = [1, 1]} : vector<8x512xf32> to vector<8x128xf32>
    %224 = arith.negf %223 : vector<8x128xf32>
    %225 = math.exp %224 : vector<8x128xf32>
    %cst_47 = arith.constant 1.000000e+00 : f32
    %226 = vector.broadcast %cst_47 : f32 to vector<8x128xf32>
    %227 = arith.addf %226, %225 : vector<8x128xf32>
    %228 = arith.divf %226, %227 : vector<8x128xf32>
    %229 = vector.extract_strided_slice %220 {offsets = [0, 128], sizes = [8, 128], strides = [1, 1]} : vector<8x256xf32> to vector<8x128xf32>
    %230 = arith.mulf %229, %209 : vector<8x128xf32>
    %231 = vector.extract_strided_slice %220 {offsets = [0, 0], sizes = [8, 128], strides = [1, 1]} : vector<8x256xf32> to vector<8x128xf32>
    %232 = arith.mulf %231, %222 : vector<8x128xf32>
    %233 = arith.addf %230, %232 : vector<8x128xf32>
    %234 = math.tanh %233 : vector<8x128xf32>
    %235 = arith.mulf %228, %234 : vector<8x128xf32>
    %c0_48 = arith.constant 0 : index
    %c0_49 = arith.constant 0 : index
    %236 = vector.load %arg9[%c0_48, %c0_49] : memref<128x128xf32, #tpu.memory_space<vmem>>, vector<128x128xf32>
    %cst_50 = arith.constant dense<0.000000e+00> : vector<8x128xf32>
    %237 = tpu.matmul %235, %236, %cst_50 {dimension_numbers = #tpu.dot_dimension_numbers<[1], [0], [0], [1], [0, 0, 1, 1], [], []>} : vector<8x128xf32>, vector<128x128xf32>, vector<8x128xf32> -> vector<8x128xf32>
    %238 = arith.addf %237, %40 : vector<8x128xf32>
    %c0_51 = arith.constant 0 : index
    %c0_52 = arith.constant 0 : index
    %239 = vector.load %arg11[%c0_51, %c0_52] : memref<1x128xf32, #tpu.memory_space<vmem>>, vector<1x128xf32>
    %240 = vector.broadcast %239 : vector<1x128xf32> to vector<8x128xf32>
    %241 = arith.addf %238, %240 : vector<8x128xf32>
    %cst_53 = arith.constant 0.000000e+00 : f32
    %242 = vector.broadcast %cst_53 : f32 to vector<8x128xf32>
    %243 = arith.maximumf %241, %242 : vector<8x128xf32>
    %c0_54 = arith.constant 0 : index
    %c0_55 = arith.constant 0 : index
    %244 = vector.load %arg12[%c0_54, %c0_55] : memref<128x6xf32, #tpu.memory_space<vmem>>, vector<128x6xf32>
    %cst_56 = arith.constant dense<0.000000e+00> : vector<8x6xf32>
    %245 = tpu.matmul %243, %244, %cst_56 {dimension_numbers = #tpu.dot_dimension_numbers<[1], [0], [0], [1], [0, 0, 1, 1], [], []>} : vector<8x128xf32>, vector<128x6xf32>, vector<8x6xf32> -> vector<8x6xf32>
    %c0_57 = arith.constant 0 : index
    %c0_58 = arith.constant 0 : index
    %246 = vector.load %arg13[%c0_57, %c0_58] : memref<1x6xf32, #tpu.memory_space<vmem>>, vector<1x6xf32>
    %247 = vector.broadcast %246 : vector<1x6xf32> to vector<8x6xf32>
    %248 = arith.addf %245, %247 : vector<8x6xf32>
    %c0_59 = arith.constant 0 : index
    %c0_60 = arith.constant 0 : index
    %249 = vector.load %arg14[%c0_59, %c0_60] : memref<8x6xf32, #tpu.memory_space<vmem>>, vector<8x6xf32>
    tpu.vector_store %arg14[%c0_59, %c0_60], %248 {strides = array<i32>} : memref<8x6xf32, #tpu.memory_space<vmem>>, vector<8x6xf32>,
    return
  }
}

</mosaic_0001>

<llo_original>
// kernel: tpu_custom_call.1
$region0: #{tpu_custom_call.1}
  #allocation0 [shape = 'u32[]', space=smem, size = 0x4, offset = 0x4, fixed_abs, tag = 'smem constant byte address 0x4 - core index']
  #allocation1 [shape = 'u32[72,128]{1,0:T(1,128)}', space=vmem, size = 0x9000, scoped, tag = 'internal scratch']
  %s0 = inlined_call_operand.vmem [shape: s32[64,1], index: 0, kind: input, shape index: {}]
  %s1 = inlined_call_operand.vmem [shape: f32[64,1], index: 1, kind: input, shape index: {}]
  %s2 = inlined_call_operand.vmem [shape: f32[128,32], index: 2, kind: input, shape index: {}]
  %s3 = inlined_call_operand.vmem [shape: f32[32,512], index: 3, kind: input, shape index: {}]
  %s4 = inlined_call_operand.hbm [shape: f32[128,512], index: 4, kind: input, shape index: {}]
  %s5 = inlined_call_operand.vmem [shape: f32[1,512], index: 5, kind: input, shape index: {}]
  %s6 = inlined_call_operand.vmem [shape: f32[32,512], index: 6, kind: input, shape index: {}]
  %s7 = inlined_call_operand.hbm [shape: f32[128,512], index: 7, kind: input, shape index: {}]
  %s8 = inlined_call_operand.vmem [shape: f32[1,512], index: 8, kind: input, shape index: {}]
  %s9 = inlined_call_operand.hbm [shape: f32[128,128], index: 9, kind: input, shape index: {}]
  %s10 = inlined_call_operand.hbm [shape: f32[128,128], index: 10, kind: input, shape index: {}]
  %s11 = inlined_call_operand.vmem [shape: f32[1,128], index: 11, kind: input, shape index: {}]
  %s12 = inlined_call_operand.vmem [shape: f32[128,6], index: 12, kind: input, shape index: {}]
  %s13 = inlined_call_operand.vmem [shape: f32[1,6], index: 13, kind: input, shape index: {}]
  %s14 = inlined_call_operand.hbm [shape: f32[8,6], index: 14, kind: output, shape index: {}]
  %s15 = sld [smem:[#allocation0]]
  $region82: #{tpu_custom_call.1} parent=0
    _
  %s17 = ssub.s32 1, %s15
  %s18 = scalar_select 0, %s17, %s15
  $region1: #{tpu_custom_call.1} parent=0
    #allocation2 [shape = 'u8[262144]{0}', space=vmem, size = 0x40000, scoped, tag = 'input window, operand 4, single buffered']
    #allocation3 [shape = 's32[1]{0}', space=sflag, size = 0x4, scoped, tag = 'scoped memory for tpu_custom_call.1']
    #allocation4 [shape = 's32[1]{0}', space=sflag, size = 0x4, scoped, tag = 'scoped memory for tpu_custom_call.1']
    #allocation5 [shape = 'u8[262144]{0}', space=vmem, size = 0x40000, scoped, tag = 'input window, operand 7, single buffered']
    #allocation6 [shape = 's32[1]{0}', space=sflag, size = 0x4, scoped, tag = 'scoped memory for tpu_custom_call.1']
    #allocation7 [shape = 'u8[65536]{0}', space=vmem, size = 0x10000, scoped, tag = 'input window, operand 9, single buffered']
    #allocation8 [shape = 'u8[65536]{0}', space=vmem, size = 0x10000, scoped, tag = 'input window, operand 10, single buffered']
    #allocation9 [shape = 's32[1]{0}', space=sflag, size = 0x4, scoped, tag = 'scoped memory for tpu_custom_call.1']
    #allocation10 [shape = 'u8[4096]{0}', space=vmem, size = 0x1000, scoped, tag = 'output window, operand 0, single buffered']
    %19 = vsyncpa [#allocation3], 0
    %20 = vsyncpa [#allocation6], 0
    %21 = vsyncpa [#allocation9], 0
    %22 = vsyncpa [#allocation4], 0
    // Predicated region
    $region2: #{tpu_custom_call.1} parent=1 // pred_check
      _
    $region3: #{tpu_custom_call.1} parent=1 // pred_check_branch
      %24 = sbr.rel (0) target = $region5
    $region4: #{tpu_custom_call.1} parent=1 // pred_region
      _
    $region5: #{tpu_custom_call.1} parent=1 // pred_fallthru
      _
    // Predicated region
    $region6: #{tpu_custom_call.1} parent=1 // pred_check
      _
    $region7: #{tpu_custom_call.1} parent=1 // pred_check_branch
      %26 = sbr.rel (0) target = $region9
    $region8: #{tpu_custom_call.1} parent=1 // pred_region
      _
    $region9: #{tpu_custom_call.1} parent=1 // pred_fallthru
      _
    // Predicated region
    $region10: #{tpu_custom_call.1} parent=1 // pred_check
      _
    $region11: #{tpu_custom_call.1} parent=1 // pred_check_branch
      %28 = sbr.rel (0) target = $region13
    $region12: #{tpu_custom_call.1} parent=1 // pred_region
      _
    $region13: #{tpu_custom_call.1} parent=1 // pred_fallthru
      _
    // Predicated region
    $region14: #{tpu_custom_call.1} parent=1 // pred_check
      _
    $region15: #{tpu_custom_call.1} parent=1 // pred_check_branch
      %30 = sbr.rel (0) target = $region17
    $region16: #{tpu_custom_call.1} parent=1 // pred_region
      _
    $region17: #{tpu_custom_call.1} parent=1 // pred_fallthru
      _
    // Predicated region
    $region18: #{tpu_custom_call.1} parent=1 // pred_check
      _
    $region19: #{tpu_custom_call.1} parent=1 // pred_check_branch
      %32 = sbr.rel (0) target = $region21
    $region20: #{tpu_custom_call.1} parent=1 // pred_region
      %34 = vsyncadd [#allocation3], 0
      %s35 = sshll.u32 %s4, 4
      %s36 = int_to_ptr.hbm [resolvable:$true] %s35
      %s37 = sshll.u32 [#allocation2], 4
      %s38 = int_to_ptr.vmem [resolvable:$true] %s37
      %43 = dma.hbm_to_vmem [thread:$0]  %s36, 8192, %s38, [#allocation3], 512, 512, 32
    $region21: #{tpu_custom_call.1} parent=1 // pred_fallthru
      _
    // Predicated region
    $region22: #{tpu_custom_call.1} parent=1 // pred_check
      _
    $region23: #{tpu_custom_call.1} parent=1 // pred_check_branch
      %45 = sbr.rel (0) target = $region25
    $region24: #{tpu_custom_call.1} parent=1 // pred_region
      _
    $region25: #{tpu_custom_call.1} parent=1 // pred_fallthru
      _
    // Predicated region
    $region26: #{tpu_custom_call.1} parent=1 // pred_check
      _
    $region27: #{tpu_custom_call.1} parent=1 // pred_check_branch
      %47 = sbr.rel (0) target = $region29
    $region28: #{tpu_custom_call.1} parent=1 // pred_region
      _
    $region29: #{tpu_custom_call.1} parent=1 // pred_fallthru
      _
    // Predicated region
    $region30: #{tpu_custom_call.1} parent=1 // pred_check
      _
    $region31: #{tpu_custom_call.1} parent=1 // pred_check_branch
      %49 = sbr.rel (0) target = $region33
    $region32: #{tpu_custom_call.1} parent=1 // pred_region
      %51 = vsyncadd [#allocation6], 0
      %s52 = sshll.u32 %s7, 4
      %s53 = int_to_ptr.hbm [resolvable:$true] %s52
      %s54 = sshll.u32 [#allocation5], 4
      %s55 = int_to_ptr.vmem [resolvable:$true] %s54
      %60 = dma.hbm_to_vmem [thread:$0]  %s53, 8192, %s55, [#allocation6], 512, 512, 32
    $region33: #{tpu_custom_call.1} parent=1 // pred_fallthru
      _
    // Predicated region
    $region34: #{tpu_custom_call.1} parent=1 // pred_check
      _
    $region35: #{tpu_custom_call.1} parent=1 // pred_check_branch
      %62 = sbr.rel (0) target = $region37
    $region36: #{tpu_custom_call.1} parent=1 // pred_region
      _
    $region37: #{tpu_custom_call.1} parent=1 // pred_fallthru
      _
    // Predicated region
    $region38: #{tpu_custom_call.1} parent=1 // pred_check
      _
    $region39: #{tpu_custom_call.1} parent=1 // pred_check_branch
      %64 = sbr.rel (0) target = $region41
    $region40: #{tpu_custom_call.1} parent=1 // pred_region
      %66 = vsyncadd [#allocation6], 0
      %s67 = sshll.u32 %s9, 4
      %s68 = int_to_ptr.hbm [resolvable:$true] %s67
      %s69 = sshll.u32 [#allocation7], 4
      %s70 = int_to_ptr.vmem [resolvable:$true] %s69
      %75 = dma.hbm_to_vmem [thread:$0]  %s68, 2048, %s70, [#allocation6], 128, 128, 8
    $region41: #{tpu_custom_call.1} parent=1 // pred_fallthru
      _
    // Predicated region
    $region42: #{tpu_custom_call.1} parent=1 // pred_check
      _
    $region43: #{tpu_custom_call.1} parent=1 // pred_check_branch
      %77 = sbr.rel (0) target = $region45
    $region44: #{tpu_custom_call.1} parent=1 // pred_region
      %79 = vsyncadd [#allocation9], 0
      %s80 = sshll.u32 %s10, 4
      %s81 = int_to_ptr.hbm [resolvable:$true] %s80
      %s82 = sshll.u32 [#allocation8], 4
      %s83 = int_to_ptr.vmem [resolvable:$true] %s82
      %88 = dma.hbm_to_vmem [thread:$0]  %s81, 2048, %s83, [#allocation9], 128, 128, 8
    $region45: #{tpu_custom_call.1} parent=1 // pred_fallthru
      _
    // Predicated region
    $region46: #{tpu_custom_call.1} parent=1 // pred_check
      _
    $region47: #{tpu_custom_call.1} parent=1 // pred_check_branch
      %90 = sbr.rel (0) target = $region49
    $region48: #{tpu_custom_call.1} parent=1 // pred_region
      _
    $region49: #{tpu_custom_call.1} parent=1 // pred_fallthru
      _
    // Predicated region
    $region50: #{tpu_custom_call.1} parent=1 // pred_check
      _
    $region51: #{tpu_custom_call.1} parent=1 // pred_check_branch
      %92 = sbr.rel (0) target = $region53
    $region52: #{tpu_custom_call.1} parent=1 // pred_region
      _
    $region53: #{tpu_custom_call.1} parent=1 // pred_fallthru
      _
    // Predicated region
    $region54: #{tpu_custom_call.1} parent=1 // pred_check
      _
    $region55: #{tpu_custom_call.1} parent=1 // pred_check_branch
      %94 = sbr.rel (0) target = $region57
    $region56: #{tpu_custom_call.1} parent=1 // pred_region
      _
    $region57: #{tpu_custom_call.1} parent=1 // pred_fallthru
      _
    // Predicated region
    $region58: #{tpu_custom_call.1} parent=1 // pred_check
      _
    $region59: #{tpu_custom_call.1} parent=1 // pred_check_branch
      %96 = sbr.rel (0) target = $region61
    $region60: #{tpu_custom_call.1} parent=1 // pred_region
      %98 = dma.done [#allocation3], 8192
    $region61: #{tpu_custom_call.1} parent=1 // pred_fallthru
      _
    // Predicated region
    $region62: #{tpu_custom_call.1} parent=1 // pred_check
      _
    $region63: #{tpu_custom_call.1} parent=1 // pred_check_branch
      %100 = sbr.rel (0) target = $region65
    $region64: #{tpu_custom_call.1} parent=1 // pred_region
      %102 = dma.done [#allocation6], 8192
    $region65: #{tpu_custom_call.1} parent=1 // pred_fallthru
      _
    // Predicated region
    $region66: #{tpu_custom_call.1} parent=1 // pred_check
      _
    $region67: #{tpu_custom_call.1} parent=1 // pred_check_branch
      %104 = sbr.rel (0) target = $region69
    $region68: #{tpu_custom_call.1} parent=1 // pred_region
      %106 = dma.done [#allocation6], 2048
    $region69: #{tpu_custom_call.1} parent=1 // pred_fallthru
      _
    // Predicated region
    $region70: #{tpu_custom_call.1} parent=1 // pred_check
      _
    $region71: #{tpu_custom_call.1} parent=1 // pred_check_branch
      %108 = sbr.rel (0) target = $region73
    $region72: #{tpu_custom_call.1} parent=1 // pred_region
      %110 = dma.done [#allocation9], 2048
    $region73: #{tpu_custom_call.1} parent=1 // pred_fallthru
      _
    %v111 = vld [vmem:[%s0] sm:$0xff]
    %v112 = vld [vmem:[%s0 + $0x8] sm:$0xff]
    %v113 = vld [vmem:[%s0 + $0x10] sm:$0xff]
    %v114 = vld [vmem:[%s0 + $0x18] sm:$0xff]
    %v115 = vld [vmem:[%s0 + $0x20] sm:$0xff]
    %v116 = vld [vmem:[%s0 + $0x28] sm:$0xff]
    %v117 = vld [vmem:[%s0 + $0x30] sm:$0xff]
    %v118 = vld [vmem:[%s0 + $0x38] sm:$0xff]
    %v119 = vlaneseq
    %v120 = vand.u32 %v119, 127
    %121 = vset.pattern.permute.xlu0 0
    %122 = vperm.xlu0 %121, %v111
    %v123 = vpop.permute.xlu0 %122
    %124 = vset.pattern.permute.xlu0 0
    %125 = vperm.xlu0 %124, %v112
    %v126 = vpop.permute.xlu0 %125
    %127 = vset.pattern.permute.xlu0 0
    %128 = vperm.xlu0 %127, %v113
    %v129 = vpop.permute.xlu0 %128
    %130 = vset.pattern.permute.xlu0 0
    %131 = vperm.xlu0 %130, %v114
    %v132 = vpop.permute.xlu0 %131
    %133 = vset.pattern.permute.xlu0 0
    %134 = vperm.xlu0 %133, %v115
    %v135 = vpop.permute.xlu0 %134
    %136 = vset.pattern.permute.xlu0 0
    %137 = vperm.xlu0 %136, %v116
    %v138 = vpop.permute.xlu0 %137
    %139 = vset.pattern.permute.xlu0 0
    %140 = vperm.xlu0 %139, %v117
    %v141 = vpop.permute.xlu0 %140
    %142 = vset.pattern.permute.xlu0 0
    %143 = vperm.xlu0 %142, %v118
    %v144 = vpop.permute.xlu0 %143
    %vm145 = vcmp.eq.s32.totalorder %v120, %v123
    %vm146 = vcmp.eq.s32.totalorder %v120, %v126
    %vm147 = vcmp.eq.s32.totalorder %v120, %v129
    %vm148 = vcmp.eq.s32.totalorder %v120, %v132
    %vm149 = vcmp.eq.s32.totalorder %v120, %v135
    %vm150 = vcmp.eq.s32.totalorder %v120, %v138
    %vm151 = vcmp.eq.s32.totalorder %v120, %v141
    %vm152 = vcmp.eq.s32.totalorder %v120, %v144
    %v153 = vsel %vm145, 1, 0
    %v154 = vsel %vm146, 1, 0
    %v155 = vsel %vm147, 1, 0
    %v156 = vsel %vm148, 1, 0
    %v157 = vsel %vm149, 1, 0
    %v158 = vsel %vm150, 1, 0
    %v159 = vsel %vm151, 1, 0
    %v160 = vsel %vm152, 1, 0
    %v161 = vcvt.s32.f32 %v153
    %v162 = vcvt.s32.f32 %v154
    %v163 = vcvt.s32.f32 %v155
    %v164 = vcvt.s32.f32 %v156
    %v165 = vcvt.s32.f32 %v157
    %v166 = vcvt.s32.f32 %v158
    %v167 = vcvt.s32.f32 %v159
    %v168 = vcvt.s32.f32 %v160
    %v169 = vld [vmem:[%s2] sm:$0xff]
    %v170 = vld [vmem:[%s2 + $0x8] sm:$0xff]
    %v171 = vld [vmem:[%s2 + $0x10] sm:$0xff]
    %v172 = vld [vmem:[%s2 + $0x18] sm:$0xff]
    %v173 = vld [vmem:[%s2 + $0x20] sm:$0xff]
    %v174 = vld [vmem:[%s2 + $0x28] sm:$0xff]
    %v175 = vld [vmem:[%s2 + $0x30] sm:$0xff]
    %v176 = vld [vmem:[%s2 + $0x38] sm:$0xff]
    %v177 = vld [vmem:[%s2 + $0x40] sm:$0xff]
    %v178 = vld [vmem:[%s2 + $0x48] sm:$0xff]
    %v179 = vld [vmem:[%s2 + $0x50] sm:$0xff]
    %v180 = vld [vmem:[%s2 + $0x58] sm:$0xff]
    %v181 = vld [vmem:[%s2 + $0x60] sm:$0xff]
    %v182 = vld [vmem:[%s2 + $0x68] sm:$0xff]
    %v183 = vld [vmem:[%s2 + $0x70] sm:$0xff]
    %v184 = vld [vmem:[%s2 + $0x78] sm:$0xff]
    %185 = vmatpush.msra.mxu0 %v184
    %186 = vmatpush.msra.mxu0 %v183
    %187 = vmatpush.msra.mxu0 %v182
    %188 = vmatpush.msra.mxu0 %v181
    %189 = vmatpush.msra.mxu0 %v180
    %190 = vmatpush.msra.mxu0 %v179
    %191 = vmatpush.msra.mxu0 %v178
    %192 = vmatpush.msra.mxu0 %v177
    %193 = vmatpush.msra.mxu0 %v176
    %194 = vmatpush.msra.mxu0 %v175
    %195 = vmatpush.msra.mxu0 %v174
    %196 = vmatpush.msra.mxu0 %v173
    %197 = vmatpush.msra.mxu0 %v172
    %198 = vmatpush.msra.mxu0 %v171
    %199 = vmatpush.msra.mxu0 %v170
    %200 = vmatpush.msra.mxu0 %v169
    %201 = vmatmul.f32.gmra.mxu0 %v161
    %v202 = vpop.f32.mrf.mxu0
    %v203 = vadd.f32 0.0, %v202
    %204 = vmatmul.f32.gmra.mxu0 %v162
    %v205 = vpop.f32.mrf.mxu0
    %v206 = vadd.f32 0.0, %v205
    %207 = vmatmul.f32.gmra.mxu0 %v163
    %v208 = vpop.f32.mrf.mxu0
    %v209 = vadd.f32 0.0, %v208
    %210 = vmatmul.f32.gmra.mxu0 %v164
    %v211 = vpop.f32.mrf.mxu0
    %v212 = vadd.f32 0.0, %v211
    %213 = vmatmul.f32.gmra.mxu0 %v165
    %v214 = vpop.f32.mrf.mxu0
    %v215 = vadd.f32 0.0, %v214
    %216 = vmatmul.f32.gmra.mxu0 %v166
    %v217 = vpop.f32.mrf.mxu0
    %v218 = vadd.f32 0.0, %v217
    %219 = vmatmul.f32.gmra.mxu0 %v167
    %v220 = vpop.f32.mrf.mxu0
    %v221 = vadd.f32 0.0, %v220
    %222 = vmatmul.f32.gmra.mxu0 %v168
    %v223 = vpop.f32.mrf.mxu0
    %v224 = vadd.f32 0.0, %v223
    %225 = vdwg.mxu0
    %v226 = vld [vmem:[%s1] sm:$0xff]
    %v227 = vld [vmem:[%s1 + $0x8] sm:$0xff]
    %v228 = vld [vmem:[%s1 + $0x10] sm:$0xff]
    %v229 = vld [vmem:[%s1 + $0x18] sm:$0xff]
    %v230 = vld [vmem:[%s1 + $0x20] sm:$0xff]
    %v231 = vld [vmem:[%s1 + $0x28] sm:$0xff]
    %v232 = vld [vmem:[%s1 + $0x30] sm:$0xff]
    %v233 = vld [vmem:[%s1 + $0x38] sm:$0xff]
    %235 = vset.pattern.permute.xlu0 0
    %236 = vperm.xlu0 %235, %v226
    %v237 = vpop.permute.xlu0 %236
    %240 = vset.pattern.permute.xlu0 0
    %241 = vperm.xlu0 %240, %v227
    %v242 = vpop.permute.xlu0 %241
    %245 = vset.pattern.permute.xlu0 0
    %246 = vperm.xlu0 %245, %v228
    %v247 = vpop.permute.xlu0 %246
    %250 = vset.pattern.permute.xlu0 0
    %251 = vperm.xlu0 %250, %v229
    %v252 = vpop.permute.xlu0 %251
    %255 = vset.pattern.permute.xlu0 0
    %256 = vperm.xlu0 %255, %v230
    %v257 = vpop.permute.xlu0 %256
    %260 = vset.pattern.permute.xlu0 0
    %261 = vperm.xlu0 %260, %v231
    %v262 = vpop.permute.xlu0 %261
    %265 = vset.pattern.permute.xlu0 0
    %266 = vperm.xlu0 %265, %v232
    %v267 = vpop.permute.xlu0 %266
    %270 = vset.pattern.permute.xlu0 0
    %271 = vperm.xlu0 %270, %v233
    %v272 = vpop.permute.xlu0 %271
    %v274 = vmul.f32 %v203, %v237
    %v275 = vmul.f32 %v206, %v242
    %v276 = vmul.f32 %v209, %v247
    %v277 = vmul.f32 %v212, %v252
    %v278 = vmul.f32 %v215, %v257
    %v279 = vmul.f32 %v218, %v262
    %v280 = vmul.f32 %v221, %v267
    %v281 = vmul.f32 %v224, %v272
    %v282 = vld [vmem:[%s3] sm:$0xff]
    %v283 = vld [vmem:[%s3 + $0x8] sm:$0xff]
    %v284 = vld [vmem:[%s3 + $0x10] sm:$0xff]
    %v285 = vld [vmem:[%s3 + $0x18] sm:$0xff]
    %v286 = vld [vmem:[%s3 + $0x20] sm:$0xff]
    %v287 = vld [vmem:[%s3 + $0x28] sm:$0xff]
    %v288 = vld [vmem:[%s3 + $0x30] sm:$0xff]
    %v289 = vld [vmem:[%s3 + $0x38] sm:$0xff]
    %v290 = vld [vmem:[%s3 + $0x40] sm:$0xff]
    %v291 = vld [vmem:[%s3 + $0x48] sm:$0xff]
    %v292 = vld [vmem:[%s3 + $0x50] sm:$0xff]
    %v293 = vld [vmem:[%s3 + $0x58] sm:$0xff]
    %v294 = vld [vmem:[%s3 + $0x60] sm:$0xff]
    %v295 = vld [vmem:[%s3 + $0x68] sm:$0xff]
    %v296 = vld [vmem:[%s3 + $0x70] sm:$0xff]
    %v297 = vld [vmem:[%s3 + $0x78] sm:$0xff]
    %v298 = vld [vmem:[%s5] sm:$0xf]
    %v300 = vperm.slane %v298, 0
    %v301 = vperm.slane %v298, 1
    %v302 = vperm.slane %v298, 2
    %v303 = vperm.slane %v298, 3
    %vm308 = vcmask 261120
    %v310 = vsel %vm308, %v274, 0
    %v313 = vsel %vm308, %v275, 0
    %v316 = vsel %vm308, %v276, 0
    %v319 = vsel %vm308, %v277, 0
    %v322 = vsel %vm308, %v278, 0
    %v325 = vsel %vm308, %v279, 0
    %v328 = vsel %vm308, %v280, 0
    %v331 = vsel %vm308, %v281, 0
    %333 = vmatpush.msra.mxu0 0.0
    %334 = vmatpush.msra.mxu0 0.0
    %335 = vmatpush.msra.mxu0 0.0
    %336 = vmatpush.msra.mxu0 0.0
    %337 = vmatpush.msra.mxu0 0.0
    %338 = vmatpush.msra.mxu0 0.0
    %339 = vmatpush.msra.mxu0 0.0
    %340 = vmatpush.msra.mxu0 0.0
    %341 = vmatpush.msra.mxu0 0.0
    %342 = vmatpush.msra.mxu0 0.0
    %343 = vmatpush.msra.mxu0 0.0
    %344 = vmatpush.msra.mxu0 0.0
    %345 = vmatpush.msra.mxu0 %v294
    %346 = vmatpush.msra.mxu0 %v290
    %347 = vmatpush.msra.mxu0 %v286
    %348 = vmatpush.msra.mxu0 %v282
    %349 = vmatmul.f32.gmra.mxu0 %v310
    %v350 = vpop.f32.mrf.mxu0
    %v351 = vadd.f32 %v300, %v350
    %352 = vmatmul.f32.gmra.mxu0 %v313
    %v353 = vpop.f32.mrf.mxu0
    %v354 = vadd.f32 %v300, %v353
    %355 = vmatmul.f32.gmra.mxu0 %v316
    %v356 = vpop.f32.mrf.mxu0
    %v357 = vadd.f32 %v300, %v356
    %358 = vmatmul.f32.gmra.mxu0 %v319
    %v359 = vpop.f32.mrf.mxu0
    %v360 = vadd.f32 %v300, %v359
    %361 = vmatmul.f32.gmra.mxu0 %v322
    %v362 = vpop.f32.mrf.mxu0
    %v363 = vadd.f32 %v300, %v362
    %364 = vmatmul.f32.gmra.mxu0 %v325
    %v365 = vpop.f32.mrf.mxu0
    %v366 = vadd.f32 %v300, %v365
    %367 = vmatmul.f32.gmra.mxu0 %v328
    %v368 = vpop.f32.mrf.mxu0
    %v369 = vadd.f32 %v300, %v368
    %370 = vmatmul.f32.gmra.mxu0 %v331
    %v371 = vpop.f32.mrf.mxu0
    %v372 = vadd.f32 %v300, %v371
    %373 = vdwg.mxu0
    %374 = vmatpush.msra.mxu0 0.0
    %375 = vmatpush.msra.mxu0 0.0
    %376 = vmatpush.msra.mxu0 0.0
    %377 = vmatpush.msra.mxu0 0.0
    %378 = vmatpush.msra.mxu0 0.0
    %379 = vmatpush.msra.mxu0 0.0
    %380 = vmatpush.msra.mxu0 0.0
    %381 = vmatpush.msra.mxu0 0.0
    %382 = vmatpush.msra.mxu0 0.0
    %383 = vmatpush.msra.mxu0 0.0
    %384 = vmatpush.msra.mxu0 0.0
    %385 = vmatpush.msra.mxu0 0.0
    %386 = vmatpush.msra.mxu0 %v295
    %387 = vmatpush.msra.mxu0 %v291
    %388 = vmatpush.msra.mxu0 %v287
    %389 = vmatpush.msra.mxu0 %v283
    %390 = vmatmul.f32.gmra.mxu0 %v310
    %v391 = vpop.f32.mrf.mxu0
    %v392 = vadd.f32 %v301, %v391
    %393 = vmatmul.f32.gmra.mxu0 %v313
    %v394 = vpop.f32.mrf.mxu0
    %v395 = vadd.f32 %v301, %v394
    %396 = vmatmul.f32.gmra.mxu0 %v316
    %v397 = vpop.f32.mrf.mxu0
    %v398 = vadd.f32 %v301, %v397
    %399 = vmatmul.f32.gmra.mxu0 %v319
    %v400 = vpop.f32.mrf.mxu0
    %v401 = vadd.f32 %v301, %v400
    %402 = vmatmul.f32.gmra.mxu0 %v322
    %v403 = vpop.f32.mrf.mxu0
    %v404 = vadd.f32 %v301, %v403
    %405 = vmatmul.f32.gmra.mxu0 %v325
    %v406 = vpop.f32.mrf.mxu0
    %v407 = vadd.f32 %v301, %v406
    %408 = vmatmul.f32.gmra.mxu0 %v328
    %v409 = vpop.f32.mrf.mxu0
    %v410 = vadd.f32 %v301, %v409
    %411 = vmatmul.f32.gmra.mxu0 %v331
    %v412 = vpop.f32.mrf.mxu0
    %v413 = vadd.f32 %v301, %v412
    %414 = vdwg.mxu0
    %415 = vmatpush.msra.mxu0 0.0
    %416 = vmatpush.msra.mxu0 0.0
    %417 = vmatpush.msra.mxu0 0.0
    %418 = vmatpush.msra.mxu0 0.0
    %419 = vmatpush.msra.mxu0 0.0
    %420 = vmatpush.msra.mxu0 0.0
    %421 = vmatpush.msra.mxu0 0.0
    %422 = vmatpush.msra.mxu0 0.0
    %423 = vmatpush.msra.mxu0 0.0
    %424 = vmatpush.msra.mxu0 0.0
    %425 = vmatpush.msra.mxu0 0.0
    %426 = vmatpush.msra.mxu0 0.0
    %427 = vmatpush.msra.mxu0 %v296
    %428 = vmatpush.msra.mxu0 %v292
    %429 = vmatpush.msra.mxu0 %v288
    %430 = vmatpush.msra.mxu0 %v284
    %431 = vmatmul.f32.gmra.mxu0 %v310
    %v432 = vpop.f32.mrf.mxu0
    %v433 = vadd.f32 %v302, %v432
    %434 = vmatmul.f32.gmra.mxu0 %v313
    %v435 = vpop.f32.mrf.mxu0
    %v436 = vadd.f32 %v302, %v435
    %437 = vmatmul.f32.gmra.mxu0 %v316
    %v438 = vpop.f32.mrf.mxu0
    %v439 = vadd.f32 %v302, %v438
    %440 = vmatmul.f32.gmra.mxu0 %v319
    %v441 = vpop.f32.mrf.mxu0
    %v442 = vadd.f32 %v302, %v441
    %443 = vmatmul.f32.gmra.mxu0 %v322
    %v444 = vpop.f32.mrf.mxu0
    %v445 = vadd.f32 %v302, %v444
    %446 = vmatmul.f32.gmra.mxu0 %v325
    %v447 = vpop.f32.mrf.mxu0
    %v448 = vadd.f32 %v302, %v447
    %449 = vmatmul.f32.gmra.mxu0 %v328
    %v450 = vpop.f32.mrf.mxu0
    %v451 = vadd.f32 %v302, %v450
    %452 = vmatmul.f32.gmra.mxu0 %v331
    %v453 = vpop.f32.mrf.mxu0
    %v454 = vadd.f32 %v302, %v453
    %455 = vdwg.mxu0
    %456 = vmatpush.msra.mxu0 0.0
    %457 = vmatpush.msra.mxu0 0.0
    %458 = vmatpush.msra.mxu0 0.0
    %459 = vmatpush.msra.mxu0 0.0
    %460 = vmatpush.msra.mxu0 0.0
    %461 = vmatpush.msra.mxu0 0.0
    %462 = vmatpush.msra.mxu0 0.0
    %463 = vmatpush.msra.mxu0 0.0
    %464 = vmatpush.msra.mxu0 0.0
    %465 = vmatpush.msra.mxu0 0.0
    %466 = vmatpush.msra.mxu0 0.0
    %467 = vmatpush.msra.mxu0 0.0
    %468 = vmatpush.msra.mxu0 %v297
    %469 = vmatpush.msra.mxu0 %v293
    %470 = vmatpush.msra.mxu0 %v289
    %471 = vmatpush.msra.mxu0 %v285
    %472 = vmatmul.f32.gmra.mxu0 %v310
    %v473 = vpop.f32.mrf.mxu0
    %v474 = vadd.f32 %v303, %v473
    %475 = vmatmul.f32.gmra.mxu0 %v313
    %v476 = vpop.f32.mrf.mxu0
    %v477 = vadd.f32 %v303, %v476
    %478 = vmatmul.f32.gmra.mxu0 %v316
    %v479 = vpop.f32.mrf.mxu0
    %v480 = vadd.f32 %v303, %v479
    %481 = vmatmul.f32.gmra.mxu0 %v319
    %v482 = vpop.f32.mrf.mxu0
    %v483 = vadd.f32 %v303, %v482
    %484 = vmatmul.f32.gmra.mxu0 %v322
    %v485 = vpop.f32.mrf.mxu0
    %v486 = vadd.f32 %v303, %v485
    %487 = vmatmul.f32.gmra.mxu0 %v325
    %v488 = vpop.f32.mrf.mxu0
    %v489 = vadd.f32 %v303, %v488
    %490 = vmatmul.f32.gmra.mxu0 %v328
    %v491 = vpop.f32.mrf.mxu0
    %v492 = vadd.f32 %v303, %v491
    %493 = vmatmul.f32.gmra.mxu0 %v331
    %v494 = vpop.f32.mrf.mxu0
    %v495 = vadd.f32 %v303, %v494
    %496 = vdwg.mxu0
    %v497 = vld [vmem:[%s6] sm:$0xff]
    %v498 = vld [vmem:[%s6 + $0x10] sm:$0xff]
    %v499 = vld [vmem:[%s6 + $0x18] sm:$0xff]
    %v500 = vld [vmem:[%s6 + $0x20] sm:$0xff]
    %v501 = vld [vmem:[%s6 + $0x30] sm:$0xff]
    %v502 = vld [vmem:[%s6 + $0x38] sm:$0xff]
    %v503 = vld [vmem:[%s6 + $0x40] sm:$0xff]
    %v504 = vld [vmem:[%s6 + $0x50] sm:$0xff]
    %v505 = vld [vmem:[%s6 + $0x58] sm:$0xff]
    %v506 = vld [vmem:[%s6 + $0x60] sm:$0xff]
    %v507 = vld [vmem:[%s6 + $0x70] sm:$0xff]
    %v508 = vld [vmem:[%s6 + $0x78] sm:$0xff]
    %v509 = vld [vmem:[%s8] sm:$0xf]
    %v511 = vperm.slane %v509, 0
    %v512 = vperm.slane %v509, 2
    %v513 = vperm.slane %v509, 3
    %517 = vmatpush.msra.mxu0 0.0
    %518 = vmatpush.msra.mxu0 0.0
    %519 = vmatpush.msra.mxu0 0.0
    %520 = vmatpush.msra.mxu0 0.0
    %521 = vmatpush.msra.mxu0 0.0
    %522 = vmatpush.msra.mxu0 0.0
    %523 = vmatpush.msra.mxu0 0.0
    %524 = vmatpush.msra.mxu0 0.0
    %525 = vmatpush.msra.mxu0 0.0
    %526 = vmatpush.msra.mxu0 0.0
    %527 = vmatpush.msra.mxu0 0.0
    %528 = vmatpush.msra.mxu0 0.0
    %529 = vmatpush.msra.mxu0 %v506
    %530 = vmatpush.msra.mxu0 %v503
    %531 = vmatpush.msra.mxu0 %v500
    %532 = vmatpush.msra.mxu0 %v497
    %533 = vmatmul.f32.gmra.mxu0 %v331
    %v534 = vpop.f32.mrf.mxu0
    %v535 = vadd.f32 %v511, %v534
    %536 = vdwg.mxu0
    %537 = vmatpush.msra.mxu0 0.0
    %538 = vmatpush.msra.mxu0 0.0
    %539 = vmatpush.msra.mxu0 0.0
    %540 = vmatpush.msra.mxu0 0.0
    %541 = vmatpush.msra.mxu0 0.0
    %542 = vmatpush.msra.mxu0 0.0
    %543 = vmatpush.msra.mxu0 0.0
    %544 = vmatpush.msra.mxu0 0.0
    %545 = vmatpush.msra.mxu0 0.0
    %546 = vmatpush.msra.mxu0 0.0
    %547 = vmatpush.msra.mxu0 0.0
    %548 = vmatpush.msra.mxu0 0.0
    %549 = vmatpush.msra.mxu0 %v507
    %550 = vmatpush.msra.mxu0 %v504
    %551 = vmatpush.msra.mxu0 %v501
    %552 = vmatpush.msra.mxu0 %v498
    %553 = vmatmul.f32.gmra.mxu0 %v331
    %v554 = vpop.f32.mrf.mxu0
    %v555 = vadd.f32 %v512, %v554
    %556 = vdwg.mxu0
    %557 = vmatpush.msra.mxu0 0.0
    %558 = vmatpush.msra.mxu0 0.0
    %559 = vmatpush.msra.mxu0 0.0
    %560 = vmatpush.msra.mxu0 0.0
    %561 = vmatpush.msra.mxu0 0.0
    %562 = vmatpush.msra.mxu0 0.0
    %563 = vmatpush.msra.mxu0 0.0
    %564 = vmatpush.msra.mxu0 0.0
    %565 = vmatpush.msra.mxu0 0.0
    %566 = vmatpush.msra.mxu0 0.0
    %567 = vmatpush.msra.mxu0 0.0
    %568 = vmatpush.msra.mxu0 0.0
    %569 = vmatpush.msra.mxu0 %v508
    %570 = vmatpush.msra.mxu0 %v505
    %571 = vmatpush.msra.mxu0 %v502
    %572 = vmatpush.msra.mxu0 %v499
    %573 = vmatmul.f32.gmra.mxu0 %v331
    %v574 = vpop.f32.mrf.mxu0
    %v575 = vadd.f32 %v513, %v574
    %576 = vdwg.mxu0
    %v577 = vxor.u32 %v535, 2147483648
    %v578 = vmul.f32 %v577, 1.442695
    %v579 = vpow.pop %v578
    %v580 = vadd.f32 %v579, 1.0
    %v581 = vrcp.pop %v580
    %v582 = vmul.f32 %v580, %v581
    %v583 = vsub.f32 1.0, %v582
    %v584 = vmul.f32 %v581, %v583
    %v585 = vadd.f32 %v581, %v584
    %vm586 = vweird.f32 %v580
    %vm587 = vweird.f32 %v581
    %vm588 = vmor %vm586, %vm587
    %v589 = vsel %vm588, %v581, %v585
    %v590 = vand.u32 2147483647, %v580
    %vm591 = vcmp.eq.f32.partialorder %v590, 8.507059e+37
    %v592 = vand.u32 %v580, 2147483648
    %v593 = vor.u32 1.1754944e-38, %v592
    %v594 = vsel %vm591, %v593, %v589
    %v595 = vmul.f32 1.0, %v594
    %v596 = vtanh.pop %v555
    %v597 = vxor.u32 %v575, 2147483648
    %v598 = vmul.f32 %v597, 1.442695
    %v599 = vpow.pop %v598
    %v600 = vadd.f32 %v599, 1.0
    %v601 = vrcp.pop %v600
    %v602 = vmul.f32 %v600, %v601
    %v603 = vsub.f32 1.0, %v602
    %v604 = vmul.f32 %v601, %v603
    %v605 = vadd.f32 %v601, %v604
    %vm606 = vweird.f32 %v600
    %vm607 = vweird.f32 %v601
    %vm608 = vmor %vm606, %vm607
    %v609 = vsel %vm608, %v601, %v605
    %v610 = vand.u32 2147483647, %v600
    %vm611 = vcmp.eq.f32.partialorder %v610, 8.507059e+37
    %v612 = vand.u32 %v600, 2147483648
    %v613 = vor.u32 1.1754944e-38, %v612
    %v614 = vsel %vm611, %v613, %v609
    %v615 = vmul.f32 1.0, %v614
    %v616 = vmul.f32 %v595, %v596
    %v617 = vtanh.pop %v616
    %v618 = vmul.f32 %v615, %v617
    %v619 = vld [vmem:[#allocation8] sm:$0xff]
    %v620 = vld [vmem:[#allocation8 + $0x8] sm:$0xff]
    %v621 = vld [vmem:[#allocation8 + $0x10] sm:$0xff]
    %v622 = vld [vmem:[#allocation8 + $0x18] sm:$0xff]
    %v623 = vld [vmem:[#allocation8 + $0x20] sm:$0xff]
    %v624 = vld [vmem:[#allocation8 + $0x28] sm:$0xff]
    %v625 = vld [vmem:[#allocation8 + $0x30] sm:$0xff]
    %v626 = vld [vmem:[#allocation8 + $0x38] sm:$0xff]
    %v627 = vld [vmem:[#allocation8 + $0x40] sm:$0xff]
    %v628 = vld [vmem:[#allocation8 + $0x48] sm:$0xff]
    %v629 = vld [vmem:[#allocation8 + $0x50] sm:$0xff]
    %v630 = vld [vmem:[#allocation8 + $0x58] sm:$0xff]
    %v631 = vld [vmem:[#allocation8 + $0x60] sm:$0xff]
    %v632 = vld [vmem:[#allocation8 + $0x68] sm:$0xff]
    %v633 = vld [vmem:[#allocation8 + $0x70] sm:$0xff]
    %v634 = vld [vmem:[#allocation8 + $0x78] sm:$0xff]
    %635 = vmatpush.msra.mxu0 %v634
    %636 = vmatpush.msra.mxu0 %v633
    %637 = vmatpush.msra.mxu0 %v632
    %638 = vmatpush.msra.mxu0 %v631
    %639 = vmatpush.msra.mxu0 %v630
    %640 = vmatpush.msra.mxu0 %v629
    %641 = vmatpush.msra.mxu0 %v628
    %642 = vmatpush.msra.mxu0 %v627
    %643 = vmatpush.msra.mxu0 %v626
    %644 = vmatpush.msra.mxu0 %v625
    %645 = vmatpush.msra.mxu0 %v624
    %646 = vmatpush.msra.mxu0 %v623
    %647 = vmatpush.msra.mxu0 %v622
    %648 = vmatpush.msra.mxu0 %v621
    %649 = vmatpush.msra.mxu0 %v620
    %650 = vmatpush.msra.mxu0 %v619
    %651 = vmatmul.f32.gmra.mxu0 %v618
    %v652 = vpop.f32.mrf.mxu0
    %v653 = vadd.f32 0.0, %v652
    %654 = vdwg.mxu0
    %v655 = vld [vmem:[#allocation2] sm:$0xff]
    %v656 = vld [vmem:[#allocation2 + $0x8] sm:$0xff]
    %v657 = vld [vmem:[#allocation2 + $0x10] sm:$0xff]
    %v658 = vld [vmem:[#allocation2 + $0x18] sm:$0xff]
    %v659 = vld [vmem:[#allocation2 + $0x20] sm:$0xff]
    %v660 = vld [vmem:[#allocation2 + $0x28] sm:$0xff]
    %v661 = vld [vmem:[#allocation2 + $0x30] sm:$0xff]
    %v662 = vld [vmem:[#allocation2 + $0x38] sm:$0xff]
    %v663 = vld [vmem:[#allocation2 + $0x40] sm:$0xff]
    %v664 = vld [vmem:[#allocation2 + $0x48] sm:$0xff]
    %v665 = vld [vmem:[#allocation2 + $0x50] sm:$0xff]
    %v666 = vld [vmem:[#allocation2 + $0x58] sm:$0xff]
    %v667 = vld [vmem:[#allocation2 + $0x60] sm:$0xff]
    %v668 = vld [vmem:[#allocation2 + $0x68] sm:$0xff]
    %v669 = vld [vmem:[#allocation2 + $0x70] sm:$0xff]
    %v670 = vld [vmem:[#allocation2 + $0x78] sm:$0xff]
    %v671 = vld [vmem:[#allocation2 + $0x80] sm:$0xff]
    %v672 = vld [vmem:[#allocation2 + $0x88] sm:$0xff]
    %v673 = vld [vmem:[#allocation2 + $0x90] sm:$0xff]
    %v674 = vld [vmem:[#allocation2 + $0x98] sm:$0xff]
    %v675 = vld [vmem:[#allocation2 + $0xa0] sm:$0xff]
    %v676 = vld [vmem:[#allocation2 + $0xa8] sm:$0xff]
    %v677 = vld [vmem:[#allocation2 + $0xb0] sm:$0xff]
    %v678 = vld [vmem:[#allocation2 + $0xb8] sm:$0xff]
    %v679 = vld [vmem:[#allocation2 + $0xc0] sm:$0xff]
    %v680 = vld [vmem:[#allocation2 + $0xc8] sm:$0xff]
    %v681 = vld [vmem:[#allocation2 + $0xd0] sm:$0xff]
    %v682 = vld [vmem:[#allocation2 + $0xd8] sm:$0xff]
    %v683 = vld [vmem:[#allocation2 + $0xe0] sm:$0xff]
    %v684 = vld [vmem:[#allocation2 + $0xe8] sm:$0xff]
    %v685 = vld [vmem:[#allocation2 + $0xf0] sm:$0xff]
    %v686 = vld [vmem:[#allocation2 + $0xf8] sm:$0xff]
    %v687 = vld [vmem:[#allocation2 + $0x100] sm:$0xff]
    %v688 = vld [vmem:[#allocation2 + $0x108] sm:$0xff]
    %v689 = vld [vmem:[#allocation2 + $0x110] sm:$0xff]
    %v690 = vld [vmem:[#allocation2 + $0x118] sm:$0xff]
    %v691 = vld [vmem:[#allocation2 + $0x120] sm:$0xff]
    %v692 = vld [vmem:[#allocation2 + $0x128] sm:$0xff]
    %v693 = vld [vmem:[#allocation2 + $0x130] sm:$0xff]
    %v694 = vld [vmem:[#allocation2 + $0x138] sm:$0xff]
    %v695 = vld [vmem:[#allocation2 + $0x140] sm:$0xff]
    %v696 = vld [vmem:[#allocation2 + $0x148] sm:$0xff]
    %v697 = vld [vmem:[#allocation2 + $0x150] sm:$0xff]
    %v698 = vld [vmem:[#allocation2 + $0x158] sm:$0xff]
    %v699 = vld [vmem:[#allocation2 + $0x160] sm:$0xff]
    %v700 = vld [vmem:[#allocation2 + $0x168] sm:$0xff]
    %v701 = vld [vmem:[#allocation2 + $0x170] sm:$0xff]
    %v702 = vld [vmem:[#allocation2 + $0x178] sm:$0xff]
    %v703 = vld [vmem:[#allocation2 + $0x180] sm:$0xff]
    %v704 = vld [vmem:[#allocation2 + $0x188] sm:$0xff]
    %v705 = vld [vmem:[#allocation2 + $0x190] sm:$0xff]
    %v706 = vld [vmem:[#allocation2 + $0x198] sm:$0xff]
    %v707 = vld [vmem:[#allocation2 + $0x1a0] sm:$0xff]
    %v708 = vld [vmem:[#allocation2 + $0x1a8] sm:$0xff]
    %v709 = vld [vmem:[#allocation2 + $0x1b0] sm:$0xff]
    %v710 = vld [vmem:[#allocation2 + $0x1b8] sm:$0xff]
    %v711 = vld [vmem:[#allocation2 + $0x1c0] sm:$0xff]
    %v712 = vld [vmem:[#allocation2 + $0x1c8] sm:$0xff]
    %v713 = vld [vmem:[#allocation2 + $0x1d0] sm:$0xff]
    %v714 = vld [vmem:[#allocation2 + $0x1d8] sm:$0xff]
    %v715 = vld [vmem:[#allocation2 + $0x1e0] sm:$0xff]
    %v716 = vld [vmem:[#allocation2 + $0x1e8] sm:$0xff]
    %v717 = vld [vmem:[#allocation2 + $0x1f0] sm:$0xff]
    %v718 = vld [vmem:[#allocation2 + $0x1f8] sm:$0xff]
    %719 = vmatpush.msra.mxu0 %v715
    %720 = vmatpush.msra.mxu0 %v711
    %721 = vmatpush.msra.mxu0 %v707
    %722 = vmatpush.msra.mxu0 %v703
    %723 = vmatpush.msra.mxu0 %v699
    %724 = vmatpush.msra.mxu0 %v695
    %725 = vmatpush.msra.mxu0 %v691
    %726 = vmatpush.msra.mxu0 %v687
    %727 = vmatpush.msra.mxu0 %v683
    %728 = vmatpush.msra.mxu0 %v679
    %729 = vmatpush.msra.mxu0 %v675
    %730 = vmatpush.msra.mxu0 %v671
    %731 = vmatpush.msra.mxu0 %v667
    %732 = vmatpush.msra.mxu0 %v663
    %733 = vmatpush.msra.mxu0 %v659
    %734 = vmatpush.msra.mxu0 %v655
    %735 = vmatmul.f32.gmra.mxu0 0.0
    %v736 = vpop.f32.mrf.mxu0
    %v737 = vadd.f32 0.0, %v736
    %738 = vdwg.mxu0
    %739 = vmatpush.msra.mxu0 %v716
    %740 = vmatpush.msra.mxu0 %v712
    %741 = vmatpush.msra.mxu0 %v708
    %742 = vmatpush.msra.mxu0 %v704
    %743 = vmatpush.msra.mxu0 %v700
    %744 = vmatpush.msra.mxu0 %v696
    %745 = vmatpush.msra.mxu0 %v692
    %746 = vmatpush.msra.mxu0 %v688
    %747 = vmatpush.msra.mxu0 %v684
    %748 = vmatpush.msra.mxu0 %v680
    %749 = vmatpush.msra.mxu0 %v676
    %750 = vmatpush.msra.mxu0 %v672
    %751 = vmatpush.msra.mxu0 %v668
    %752 = vmatpush.msra.mxu0 %v664
    %753 = vmatpush.msra.mxu0 %v660
    %754 = vmatpush.msra.mxu0 %v656
    %755 = vmatmul.f32.gmra.mxu0 0.0
    %v756 = vpop.f32.mrf.mxu0
    %v757 = vadd.f32 0.0, %v756
    %758 = vdwg.mxu0
    %759 = vmatpush.msra.mxu0 %v717
    %760 = vmatpush.msra.mxu0 %v713
    %761 = vmatpush.msra.mxu0 %v709
    %762 = vmatpush.msra.mxu0 %v705
    %763 = vmatpush.msra.mxu0 %v701
    %764 = vmatpush.msra.mxu0 %v697
    %765 = vmatpush.msra.mxu0 %v693
    %766 = vmatpush.msra.mxu0 %v689
    %767 = vmatpush.msra.mxu0 %v685
    %768 = vmatpush.msra.mxu0 %v681
    %769 = vmatpush.msra.mxu0 %v677
    %770 = vmatpush.msra.mxu0 %v673
    %771 = vmatpush.msra.mxu0 %v669
    %772 = vmatpush.msra.mxu0 %v665
    %773 = vmatpush.msra.mxu0 %v661
    %774 = vmatpush.msra.mxu0 %v657
    %775 = vmatmul.f32.gmra.mxu0 0.0
    %v776 = vpop.f32.mrf.mxu0
    %v777 = vadd.f32 0.0, %v776
    %778 = vdwg.mxu0
    %779 = vmatpush.msra.mxu0 %v718
    %780 = vmatpush.msra.mxu0 %v714
    %781 = vmatpush.msra.mxu0 %v710
    %782 = vmatpush.msra.mxu0 %v706
    %783 = vmatpush.msra.mxu0 %v702
    %784 = vmatpush.msra.mxu0 %v698
    %785 = vmatpush.msra.mxu0 %v694
    %786 = vmatpush.msra.mxu0 %v690
    %787 = vmatpush.msra.mxu0 %v686
    %788 = vmatpush.msra.mxu0 %v682
    %789 = vmatpush.msra.mxu0 %v678
    %790 = vmatpush.msra.mxu0 %v674
    %791 = vmatpush.msra.mxu0 %v670
    %792 = vmatpush.msra.mxu0 %v666
    %793 = vmatpush.msra.mxu0 %v662
    %794 = vmatpush.msra.mxu0 %v658
    %795 = vmatmul.f32.gmra.mxu0 0.0
    %v796 = vpop.f32.mrf.mxu0
    %v797 = vadd.f32 0.0, %v796
    %798 = vdwg.mxu0
    %v799 = vadd.f32 %v351, %v737
    %v800 = vadd.f32 %v392, %v757
    %v801 = vadd.f32 %v433, %v777
    %v802 = vadd.f32 %v474, %v797
    %v803 = vxor.u32 %v799, 2147483648
    %v804 = vxor.u32 %v800, 2147483648
    %v805 = vmul.f32 %v803, 1.442695
    %v806 = vpow.pop %v805
    %v807 = vmul.f32 %v804, 1.442695
    %v808 = vpow.pop %v807
    %v809 = vadd.f32 %v806, 1.0
    %v810 = vadd.f32 %v808, 1.0
    %v811 = vrcp.pop %v809
    %v812 = vmul.f32 %v809, %v811
    %v813 = vsub.f32 1.0, %v812
    %v814 = vmul.f32 %v811, %v813
    %v815 = vadd.f32 %v811, %v814
    %vm816 = vweird.f32 %v809
    %vm817 = vweird.f32 %v811
    %vm818 = vmor %vm816, %vm817
    %v819 = vsel %vm818, %v811, %v815
    %v820 = vand.u32 2147483647, %v809
    %vm821 = vcmp.eq.f32.partialorder %v820, 8.507059e+37
    %v822 = vand.u32 %v809, 2147483648
    %v823 = vor.u32 1.1754944e-38, %v822
    %v824 = vsel %vm821, %v823, %v819
    %v825 = vmul.f32 1.0, %v824
    %v826 = vrcp.pop %v810
    %v827 = vmul.f32 %v810, %v826
    %v828 = vsub.f32 1.0, %v827
    %v829 = vmul.f32 %v826, %v828
    %v830 = vadd.f32 %v826, %v829
    %vm831 = vweird.f32 %v810
    %vm832 = vweird.f32 %v826
    %vm833 = vmor %vm831, %vm832
    %v834 = vsel %vm833, %v826, %v830
    %v835 = vand.u32 2147483647, %v810
    %vm836 = vcmp.eq.f32.partialorder %v835, 8.507059e+37
    %v837 = vand.u32 %v810, 2147483648
    %v838 = vor.u32 1.1754944e-38, %v837
    %v839 = vsel %vm836, %v838, %v834
    %v840 = vmul.f32 1.0, %v839
    %v841 = vtanh.pop %v801
    %v842 = vxor.u32 %v802, 2147483648
    %v843 = vmul.f32 %v842, 1.442695
    %v844 = vpow.pop %v843
    %v845 = vadd.f32 %v844, 1.0
    %v846 = vrcp.pop %v845
    %v847 = vmul.f32 %v845, %v846
    %v848 = vsub.f32 1.0, %v847
    %v849 = vmul.f32 %v846, %v848
    %v850 = vadd.f32 %v846, %v849
    %vm851 = vweird.f32 %v845
    %vm852 = vweird.f32 %v846
    %vm853 = vmor %vm851, %vm852
    %v854 = vsel %vm853, %v846, %v850
    %v855 = vand.u32 2147483647, %v845
    %vm856 = vcmp.eq.f32.partialorder %v855, 8.507059e+37
    %v857 = vand.u32 %v845, 2147483648
    %v858 = vor.u32 1.1754944e-38, %v857
    %v859 = vsel %vm856, %v858, %v854
    %v860 = vmul.f32 1.0, %v859
    %v861 = vmul.f32 %v840, 0.0
    %v862 = vmul.f32 %v825, %v841
    %v863 = vadd.f32 %v861, %v862
    %v864 = vtanh.pop %v863
    %v865 = vmul.f32 %v860, %v864
    %866 = vmatpush.msra.mxu0 %v715
    %867 = vmatpush.msra.mxu0 %v711
    %868 = vmatpush.msra.mxu0 %v707
    %869 = vmatpush.msra.mxu0 %v703
    %870 = vmatpush.msra.mxu0 %v699
    %871 = vmatpush.msra.mxu0 %v695
    %872 = vmatpush.msra.mxu0 %v691
    %873 = vmatpush.msra.mxu0 %v687
    %874 = vmatpush.msra.mxu0 %v683
    %875 = vmatpush.msra.mxu0 %v679
    %876 = vmatpush.msra.mxu0 %v675
    %877 = vmatpush.msra.mxu0 %v671
    %878 = vmatpush.msra.mxu0 %v667
    %879 = vmatpush.msra.mxu0 %v663
    %880 = vmatpush.msra.mxu0 %v659
    %881 = vmatpush.msra.mxu0 %v655
    %882 = vmatmul.f32.gmra.mxu0 %v865
    %v883 = vpop.f32.mrf.mxu0
    %v884 = vadd.f32 0.0, %v883
    %885 = vdwg.mxu0
    %886 = vmatpush.msra.mxu0 %v716
    %887 = vmatpush.msra.mxu0 %v712
    %888 = vmatpush.msra.mxu0 %v708
    %889 = vmatpush.msra.mxu0 %v704
    %890 = vmatpush.msra.mxu0 %v700
    %891 = vmatpush.msra.mxu0 %v696
    %892 = vmatpush.msra.mxu0 %v692
    %893 = vmatpush.msra.mxu0 %v688
    %894 = vmatpush.msra.mxu0 %v684
    %895 = vmatpush.msra.mxu0 %v680
    %896 = vmatpush.msra.mxu0 %v676
    %897 = vmatpush.msra.mxu0 %v672
    %898 = vmatpush.msra.mxu0 %v668
    %899 = vmatpush.msra.mxu0 %v664
    %900 = vmatpush.msra.mxu0 %v660
    %901 = vmatpush.msra.mxu0 %v656
    %902 = vmatmul.f32.gmra.mxu0 %v865
    %v903 = vpop.f32.mrf.mxu0
    %v904 = vadd.f32 0.0, %v903
    %905 = vdwg.mxu0
    %906 = vmatpush.msra.mxu0 %v717
    %907 = vmatpush.msra.mxu0 %v713
    %908 = vmatpush.msra.mxu0 %v709
    %909 = vmatpush.msra.mxu0 %v705
    %910 = vmatpush.msra.mxu0 %v701
    %911 = vmatpush.msra.mxu0 %v697
    %912 = vmatpush.msra.mxu0 %v693
    %913 = vmatpush.msra.mxu0 %v689
    %914 = vmatpush.msra.mxu0 %v685
    %915 = vmatpush.msra.mxu0 %v681
    %916 = vmatpush.msra.mxu0 %v677
    %917 = vmatpush.msra.mxu0 %v673
    %918 = vmatpush.msra.mxu0 %v669
    %919 = vmatpush.msra.mxu0 %v665
    %920 = vmatpush.msra.mxu0 %v661
    %921 = vmatpush.msra.mxu0 %v657
    %922 = vmatmul.f32.gmra.mxu0 %v865
    %v923 = vpop.f32.mrf.mxu0
    %v924 = vadd.f32 0.0, %v923
    %925 = vdwg.mxu0
    %926 = vmatpush.msra.mxu0 %v718
    %927 = vmatpush.msra.mxu0 %v714
    %928 = vmatpush.msra.mxu0 %v710
    %929 = vmatpush.msra.mxu0 %v706
    %930 = vmatpush.msra.mxu0 %v702
    %931 = vmatpush.msra.mxu0 %v698
    %932 = vmatpush.msra.mxu0 %v694
    %933 = vmatpush.msra.mxu0 %v690
    %934 = vmatpush.msra.mxu0 %v686
    %935 = vmatpush.msra.mxu0 %v682
    %936 = vmatpush.msra.mxu0 %v678
    %937 = vmatpush.msra.mxu0 %v674
    %938 = vmatpush.msra.mxu0 %v670
    %939 = vmatpush.msra.mxu0 %v666
    %940 = vmatpush.msra.mxu0 %v662
    %941 = vmatpush.msra.mxu0 %v658
    %942 = vmatmul.f32.gmra.mxu0 %v865
    %v943 = vpop.f32.mrf.mxu0
    %v944 = vadd.f32 0.0, %v943
    %945 = vdwg.mxu0
    %v946 = vadd.f32 %v354, %v884
    %v947 = vadd.f32 %v395, %v904
    %v948 = vadd.f32 %v436, %v924
    %v949 = vadd.f32 %v477, %v944
    %v950 = vxor.u32 %v946, 2147483648
    %v951 = vxor.u32 %v947, 2147483648
    %v952 = vmul.f32 %v950, 1.442695
    %v953 = vpow.pop %v952
    %v954 = vmul.f32 %v951, 1.442695
    %v955 = vpow.pop %v954
    %v956 = vadd.f32 %v953, 1.0
    %v957 = vadd.f32 %v955, 1.0
    %v958 = vrcp.pop %v956
    %v959 = vmul.f32 %v956, %v958
    %v960 = vsub.f32 1.0, %v959
    %v961 = vmul.f32 %v958, %v960
    %v962 = vadd.f32 %v958, %v961
    %vm963 = vweird.f32 %v956
    %vm964 = vweird.f32 %v958
    %vm965 = vmor %vm963, %vm964
    %v966 = vsel %vm965, %v958, %v962
    %v967 = vand.u32 2147483647, %v956
    %vm968 = vcmp.eq.f32.partialorder %v967, 8.507059e+37
    %v969 = vand.u32 %v956, 2147483648
    %v970 = vor.u32 1.1754944e-38, %v969
    %v971 = vsel %vm968, %v970, %v966
    %v972 = vmul.f32 1.0, %v971
    %v973 = vrcp.pop %v957
    %v974 = vmul.f32 %v957, %v973
    %v975 = vsub.f32 1.0, %v974
    %v976 = vmul.f32 %v973, %v975
    %v977 = vadd.f32 %v973, %v976
    %vm978 = vweird.f32 %v957
    %vm979 = vweird.f32 %v973
    %vm980 = vmor %vm978, %vm979
    %v981 = vsel %vm980, %v973, %v977
    %v982 = vand.u32 2147483647, %v957
    %vm983 = vcmp.eq.f32.partialorder %v982, 8.507059e+37
    %v984 = vand.u32 %v957, 2147483648
    %v985 = vor.u32 1.1754944e-38, %v984
    %v986 = vsel %vm983, %v985, %v981
    %v987 = vmul.f32 1.0, %v986
    %v988 = vtanh.pop %v948
    %v989 = vxor.u32 %v949, 2147483648
    %v990 = vmul.f32 %v989, 1.442695
    %v991 = vpow.pop %v990
    %v992 = vadd.f32 %v991, 1.0
    %v993 = vrcp.pop %v992
    %v994 = vmul.f32 %v992, %v993
    %v995 = vsub.f32 1.0, %v994
    %v996 = vmul.f32 %v993, %v995
    %v997 = vadd.f32 %v993, %v996
    %vm998 = vweird.f32 %v992
    %vm999 = vweird.f32 %v993
    %vm1000 = vmor %vm998, %vm999
    %v1001 = vsel %vm1000, %v993, %v997
    %v1002 = vand.u32 2147483647, %v992
    %vm1003 = vcmp.eq.f32.partialorder %v1002, 8.507059e+37
    %v1004 = vand.u32 %v992, 2147483648
    %v1005 = vor.u32 1.1754944e-38, %v1004
    %v1006 = vsel %vm1003, %v1005, %v1001
    %v1007 = vmul.f32 1.0, %v1006
    %v1008 = vmul.f32 %v987, %v863
    %v1009 = vmul.f32 %v972, %v988
    %v1010 = vadd.f32 %v1008, %v1009
    %v1011 = vtanh.pop %v1010
    %v1012 = vmul.f32 %v1007, %v1011
    %1013 = vmatpush.msra.mxu0 %v715
    %1014 = vmatpush.msra.mxu0 %v711
    %1015 = vmatpush.msra.mxu0 %v707
    %1016 = vmatpush.msra.mxu0 %v703
    %1017 = vmatpush.msra.mxu0 %v699
    %1018 = vmatpush.msra.mxu0 %v695
    %1019 = vmatpush.msra.mxu0 %v691
    %1020 = vmatpush.msra.mxu0 %v687
    %1021 = vmatpush.msra.mxu0 %v683
    %1022 = vmatpush.msra.mxu0 %v679
    %1023 = vmatpush.msra.mxu0 %v675
    %1024 = vmatpush.msra.mxu0 %v671
    %1025 = vmatpush.msra.mxu0 %v667
    %1026 = vmatpush.msra.mxu0 %v663
    %1027 = vmatpush.msra.mxu0 %v659
    %1028 = vmatpush.msra.mxu0 %v655
    %1029 = vmatmul.f32.gmra.mxu0 %v1012
    %v1030 = vpop.f32.mrf.mxu0
    %v1031 = vadd.f32 0.0, %v1030
    %1032 = vdwg.mxu0
    %1033 = vmatpush.msra.mxu0 %v716
    %1034 = vmatpush.msra.mxu0 %v712
    %1035 = vmatpush.msra.mxu0 %v708
    %1036 = vmatpush.msra.mxu0 %v704
    %1037 = vmatpush.msra.mxu0 %v700
    %1038 = vmatpush.msra.mxu0 %v696
    %1039 = vmatpush.msra.mxu0 %v692
    %1040 = vmatpush.msra.mxu0 %v688
    %1041 = vmatpush.msra.mxu0 %v684
    %1042 = vmatpush.msra.mxu0 %v680
    %1043 = vmatpush.msra.mxu0 %v676
    %1044 = vmatpush.msra.mxu0 %v672
    %1045 = vmatpush.msra.mxu0 %v668
    %1046 = vmatpush.msra.mxu0 %v664
    %1047 = vmatpush.msra.mxu0 %v660
    %1048 = vmatpush.msra.mxu0 %v656
    %1049 = vmatmul.f32.gmra.mxu0 %v1012
    %v1050 = vpop.f32.mrf.mxu0
    %v1051 = vadd.f32 0.0, %v1050
    %1052 = vdwg.mxu0
    %1053 = vmatpush.msra.mxu0 %v717
    %1054 = vmatpush.msra.mxu0 %v713
    %1055 = vmatpush.msra.mxu0 %v709
    %1056 = vmatpush.msra.mxu0 %v705
    %1057 = vmatpush.msra.mxu0 %v701
    %1058 = vmatpush.msra.mxu0 %v697
    %1059 = vmatpush.msra.mxu0 %v693
    %1060 = vmatpush.msra.mxu0 %v689
    %1061 = vmatpush.msra.mxu0 %v685
    %1062 = vmatpush.msra.mxu0 %v681
    %1063 = vmatpush.msra.mxu0 %v677
    %1064 = vmatpush.msra.mxu0 %v673
    %1065 = vmatpush.msra.mxu0 %v669
    %1066 = vmatpush.msra.mxu0 %v665
    %1067 = vmatpush.msra.mxu0 %v661
    %1068 = vmatpush.msra.mxu0 %v657
    %1069 = vmatmul.f32.gmra.mxu0 %v1012
    %v1070 = vpop.f32.mrf.mxu0
    %v1071 = vadd.f32 0.0, %v1070
    %1072 = vdwg.mxu0
    %1073 = vmatpush.msra.mxu0 %v718
    %1074 = vmatpush.msra.mxu0 %v714
    %1075 = vmatpush.msra.mxu0 %v710
    %1076 = vmatpush.msra.mxu0 %v706
    %1077 = vmatpush.msra.mxu0 %v702
    %1078 = vmatpush.msra.mxu0 %v698
    %1079 = vmatpush.msra.mxu0 %v694
    %1080 = vmatpush.msra.mxu0 %v690
    %1081 = vmatpush.msra.mxu0 %v686
    %1082 = vmatpush.msra.mxu0 %v682
    %1083 = vmatpush.msra.mxu0 %v678
    %1084 = vmatpush.msra.mxu0 %v674
    %1085 = vmatpush.msra.mxu0 %v670
    %1086 = vmatpush.msra.mxu0 %v666
    %1087 = vmatpush.msra.mxu0 %v662
    %1088 = vmatpush.msra.mxu0 %v658
    %1089 = vmatmul.f32.gmra.mxu0 %v1012
    %v1090 = vpop.f32.mrf.mxu0
    %v1091 = vadd.f32 0.0, %v1090
    %1092 = vdwg.mxu0
    %v1093 = vadd.f32 %v357, %v1031
    %v1094 = vadd.f32 %v398, %v1051
    %v1095 = vadd.f32 %v439, %v1071
    %v1096 = vadd.f32 %v480, %v1091
    %v1097 = vxor.u32 %v1093, 2147483648
    %v1098 = vxor.u32 %v1094, 2147483648
    %v1099 = vmul.f32 %v1097, 1.442695
    %v1100 = vpow.pop %v1099
    %v1101 = vmul.f32 %v1098, 1.442695
    %v1102 = vpow.pop %v1101
    %v1103 = vadd.f32 %v1100, 1.0
    %v1104 = vadd.f32 %v1102, 1.0
    %v1105 = vrcp.pop %v1103
    %v1106 = vmul.f32 %v1103, %v1105
    %v1107 = vsub.f32 1.0, %v1106
    %v1108 = vmul.f32 %v1105, %v1107
    %v1109 = vadd.f32 %v1105, %v1108
    %vm1110 = vweird.f32 %v1103
    %vm1111 = vweird.f32 %v1105
    %vm1112 = vmor %vm1110, %vm1111
    %v1113 = vsel %vm1112, %v1105, %v1109
    %v1114 = vand.u32 2147483647, %v1103
    %vm1115 = vcmp.eq.f32.partialorder %v1114, 8.507059e+37
    %v1116 = vand.u32 %v1103, 2147483648
    %v1117 = vor.u32 1.1754944e-38, %v1116
    %v1118 = vsel %vm1115, %v1117, %v1113
    %v1119 = vmul.f32 1.0, %v1118
    %v1120 = vrcp.pop %v1104
    %v1121 = vmul.f32 %v1104, %v1120
    %v1122 = vsub.f32 1.0, %v1121
    %v1123 = vmul.f32 %v1120, %v1122
    %v1124 = vadd.f32 %v1120, %v1123
    %vm1125 = vweird.f32 %v1104
    %vm1126 = vweird.f32 %v1120
    %vm1127 = vmor %vm1125, %vm1126
    %v1128 = vsel %vm1127, %v1120, %v1124
    %v1129 = vand.u32 2147483647, %v1104
    %vm1130 = vcmp.eq.f32.partialorder %v1129, 8.507059e+37
    %v1131 = vand.u32 %v1104, 2147483648
    %v1132 = vor.u32 1.1754944e-38, %v1131
    %v1133 = vsel %vm1130, %v1132, %v1128
    %v1134 = vmul.f32 1.0, %v1133
    %v1135 = vtanh.pop %v1095
    %v1136 = vxor.u32 %v1096, 2147483648
    %v1137 = vmul.f32 %v1136, 1.442695
    %v1138 = vpow.pop %v1137
    %v1139 = vadd.f32 %v1138, 1.0
    %v1140 = vrcp.pop %v1139
    %v1141 = vmul.f32 %v1139, %v1140
    %v1142 = vsub.f32 1.0, %v1141
    %v1143 = vmul.f32 %v1140, %v1142
    %v1144 = vadd.f32 %v1140, %v1143
    %vm1145 = vweird.f32 %v1139
    %vm1146 = vweird.f32 %v1140
    %vm1147 = vmor %vm1145, %vm1146
    %v1148 = vsel %vm1147, %v1140, %v1144
    %v1149 = vand.u32 2147483647, %v1139
    %vm1150 = vcmp.eq.f32.partialorder %v1149, 8.507059e+37
    %v1151 = vand.u32 %v1139, 2147483648
    %v1152 = vor.u32 1.1754944e-38, %v1151
    %v1153 = vsel %vm1150, %v1152, %v1148
    %v1154 = vmul.f32 1.0, %v1153
    %v1155 = vmul.f32 %v1134, %v1010
    %v1156 = vmul.f32 %v1119, %v1135
    %v1157 = vadd.f32 %v1155, %v1156
    %v1158 = vtanh.pop %v1157
    %v1159 = vmul.f32 %v1154, %v1158
    %1160 = vmatpush.msra.mxu0 %v715
    %1161 = vmatpush.msra.mxu0 %v711
    %1162 = vmatpush.msra.mxu0 %v707
    %1163 = vmatpush.msra.mxu0 %v703
    %1164 = vmatpush.msra.mxu0 %v699
    %1165 = vmatpush.msra.mxu0 %v695
    %1166 = vmatpush.msra.mxu0 %v691
    %1167 = vmatpush.msra.mxu0 %v687
    %1168 = vmatpush.msra.mxu0 %v683
    %1169 = vmatpush.msra.mxu0 %v679
    %1170 = vmatpush.msra.mxu0 %v675
    %1171 = vmatpush.msra.mxu0 %v671
    %1172 = vmatpush.msra.mxu0 %v667
    %1173 = vmatpush.msra.mxu0 %v663
    %1174 = vmatpush.msra.mxu0 %v659
    %1175 = vmatpush.msra.mxu0 %v655
    %1176 = vmatmul.f32.gmra.mxu0 %v1159
    %v1177 = vpop.f32.mrf.mxu0
    %v1178 = vadd.f32 0.0, %v1177
    %1179 = vdwg.mxu0
    %1180 = vmatpush.msra.mxu0 %v716
    %1181 = vmatpush.msra.mxu0 %v712
    %1182 = vmatpush.msra.mxu0 %v708
    %1183 = vmatpush.msra.mxu0 %v704
    %1184 = vmatpush.msra.mxu0 %v700
    %1185 = vmatpush.msra.mxu0 %v696
    %1186 = vmatpush.msra.mxu0 %v692
    %1187 = vmatpush.msra.mxu0 %v688
    %1188 = vmatpush.msra.mxu0 %v684
    %1189 = vmatpush.msra.mxu0 %v680
    %1190 = vmatpush.msra.mxu0 %v676
    %1191 = vmatpush.msra.mxu0 %v672
    %1192 = vmatpush.msra.mxu0 %v668
    %1193 = vmatpush.msra.mxu0 %v664
    %1194 = vmatpush.msra.mxu0 %v660
    %1195 = vmatpush.msra.mxu0 %v656
    %1196 = vmatmul.f32.gmra.mxu0 %v1159
    %v1197 = vpop.f32.mrf.mxu0
    %v1198 = vadd.f32 0.0, %v1197
    %1199 = vdwg.mxu0
    %1200 = vmatpush.msra.mxu0 %v717
    %1201 = vmatpush.msra.mxu0 %v713
    %1202 = vmatpush.msra.mxu0 %v709
    %1203 = vmatpush.msra.mxu0 %v705
    %1204 = vmatpush.msra.mxu0 %v701
    %1205 = vmatpush.msra.mxu0 %v697
    %1206 = vmatpush.msra.mxu0 %v693
    %1207 = vmatpush.msra.mxu0 %v689
    %1208 = vmatpush.msra.mxu0 %v685
    %1209 = vmatpush.msra.mxu0 %v681
    %1210 = vmatpush.msra.mxu0 %v677
    %1211 = vmatpush.msra.mxu0 %v673
    %1212 = vmatpush.msra.mxu0 %v669
    %1213 = vmatpush.msra.mxu0 %v665
    %1214 = vmatpush.msra.mxu0 %v661
    %1215 = vmatpush.msra.mxu0 %v657
    %1216 = vmatmul.f32.gmra.mxu0 %v1159
    %v1217 = vpop.f32.mrf.mxu0
    %v1218 = vadd.f32 0.0, %v1217
    %1219 = vdwg.mxu0
    %1220 = vmatpush.msra.mxu0 %v718
    %1221 = vmatpush.msra.mxu0 %v714
    %1222 = vmatpush.msra.mxu0 %v710
    %1223 = vmatpush.msra.mxu0 %v706
    %1224 = vmatpush.msra.mxu0 %v702
    %1225 = vmatpush.msra.mxu0 %v698
    %1226 = vmatpush.msra.mxu0 %v694
    %1227 = vmatpush.msra.mxu0 %v690
    %1228 = vmatpush.msra.mxu0 %v686
    %1229 = vmatpush.msra.mxu0 %v682
    %1230 = vmatpush.msra.mxu0 %v678
    %1231 = vmatpush.msra.mxu0 %v674
    %1232 = vmatpush.msra.mxu0 %v670
    %1233 = vmatpush.msra.mxu0 %v666
    %1234 = vmatpush.msra.mxu0 %v662
    %1235 = vmatpush.msra.mxu0 %v658
    %1236 = vmatmul.f32.gmra.mxu0 %v1159
    %v1237 = vpop.f32.mrf.mxu0
    %v1238 = vadd.f32 0.0, %v1237
    %1239 = vdwg.mxu0
    %v1240 = vadd.f32 %v360, %v1178
    %v1241 = vadd.f32 %v401, %v1198
    %v1242 = vadd.f32 %v442, %v1218
    %v1243 = vadd.f32 %v483, %v1238
    %v1244 = vxor.u32 %v1240, 2147483648
    %v1245 = vxor.u32 %v1241, 2147483648
    %v1246 = vmul.f32 %v1244, 1.442695
    %v1247 = vpow.pop %v1246
    %v1248 = vmul.f32 %v1245, 1.442695
    %v1249 = vpow.pop %v1248
    %v1250 = vadd.f32 %v1247, 1.0
    %v1251 = vadd.f32 %v1249, 1.0
    %v1252 = vrcp.pop %v1250
    %v1253 = vmul.f32 %v1250, %v1252
    %v1254 = vsub.f32 1.0, %v1253
    %v1255 = vmul.f32 %v1252, %v1254
    %v1256 = vadd.f32 %v1252, %v1255
    %vm1257 = vweird.f32 %v1250
    %vm1258 = vweird.f32 %v1252
    %vm1259 = vmor %vm1257, %vm1258
    %v1260 = vsel %vm1259, %v1252, %v1256
    %v1261 = vand.u32 2147483647, %v1250
    %vm1262 = vcmp.eq.f32.partialorder %v1261, 8.507059e+37
    %v1263 = vand.u32 %v1250, 2147483648
    %v1264 = vor.u32 1.1754944e-38, %v1263
    %v1265 = vsel %vm1262, %v1264, %v1260
    %v1266 = vmul.f32 1.0, %v1265
    %v1267 = vrcp.pop %v1251
    %v1268 = vmul.f32 %v1251, %v1267
    %v1269 = vsub.f32 1.0, %v1268
    %v1270 = vmul.f32 %v1267, %v1269
    %v1271 = vadd.f32 %v1267, %v1270
    %vm1272 = vweird.f32 %v1251
    %vm1273 = vweird.f32 %v1267
    %vm1274 = vmor %vm1272, %vm1273
    %v1275 = vsel %vm1274, %v1267, %v1271
    %v1276 = vand.u32 2147483647, %v1251
    %vm1277 = vcmp.eq.f32.partialorder %v1276, 8.507059e+37
    %v1278 = vand.u32 %v1251, 2147483648
    %v1279 = vor.u32 1.1754944e-38, %v1278
    %v1280 = vsel %vm1277, %v1279, %v1275
    %v1281 = vmul.f32 1.0, %v1280
    %v1282 = vtanh.pop %v1242
    %v1283 = vxor.u32 %v1243, 2147483648
    %v1284 = vmul.f32 %v1283, 1.442695
    %v1285 = vpow.pop %v1284
    %v1286 = vadd.f32 %v1285, 1.0
    %v1287 = vrcp.pop %v1286
    %v1288 = vmul.f32 %v1286, %v1287
    %v1289 = vsub.f32 1.0, %v1288
    %v1290 = vmul.f32 %v1287, %v1289
    %v1291 = vadd.f32 %v1287, %v1290
    %vm1292 = vweird.f32 %v1286
    %vm1293 = vweird.f32 %v1287
    %vm1294 = vmor %vm1292, %vm1293
    %v1295 = vsel %vm1294, %v1287, %v1291
    %v1296 = vand.u32 2147483647, %v1286
    %vm1297 = vcmp.eq.f32.partialorder %v1296, 8.507059e+37
    %v1298 = vand.u32 %v1286, 2147483648
    %v1299 = vor.u32 1.1754944e-38, %v1298
    %v1300 = vsel %vm1297, %v1299, %v1295
    %v1301 = vmul.f32 1.0, %v1300
    %v1302 = vmul.f32 %v1281, %v1157
    %v1303 = vmul.f32 %v1266, %v1282
    %v1304 = vadd.f32 %v1302, %v1303
    %v1305 = vtanh.pop %v1304
    %v1306 = vmul.f32 %v1301, %v1305
    %1307 = vmatpush.msra.mxu0 %v715
    %1308 = vmatpush.msra.mxu0 %v711
    %1309 = vmatpush.msra.mxu0 %v707
    %1310 = vmatpush.msra.mxu0 %v703
    %1311 = vmatpush.msra.mxu0 %v699
    %1312 = vmatpush.msra.mxu0 %v695
    %1313 = vmatpush.msra.mxu0 %v691
    %1314 = vmatpush.msra.mxu0 %v687
    %1315 = vmatpush.msra.mxu0 %v683
    %1316 = vmatpush.msra.mxu0 %v679
    %1317 = vmatpush.msra.mxu0 %v675
    %1318 = vmatpush.msra.mxu0 %v671
    %1319 = vmatpush.msra.mxu0 %v667
    %1320 = vmatpush.msra.mxu0 %v663
    %1321 = vmatpush.msra.mxu0 %v659
    %1322 = vmatpush.msra.mxu0 %v655
    %1323 = vmatmul.f32.gmra.mxu0 %v1306
    %v1324 = vpop.f32.mrf.mxu0
    %v1325 = vadd.f32 0.0, %v1324
    %1326 = vdwg.mxu0
    %1327 = vmatpush.msra.mxu0 %v716
    %1328 = vmatpush.msra.mxu0 %v712
    %1329 = vmatpush.msra.mxu0 %v708
    %1330 = vmatpush.msra.mxu0 %v704
    %1331 = vmatpush.msra.mxu0 %v700
    %1332 = vmatpush.msra.mxu0 %v696
    %1333 = vmatpush.msra.mxu0 %v692
    %1334 = vmatpush.msra.mxu0 %v688
    %1335 = vmatpush.msra.mxu0 %v684
    %1336 = vmatpush.msra.mxu0 %v680
    %1337 = vmatpush.msra.mxu0 %v676
    %1338 = vmatpush.msra.mxu0 %v672
    %1339 = vmatpush.msra.mxu0 %v668
    %1340 = vmatpush.msra.mxu0 %v664
    %1341 = vmatpush.msra.mxu0 %v660
    %1342 = vmatpush.msra.mxu0 %v656
    %1343 = vmatmul.f32.gmra.mxu0 %v1306
    %v1344 = vpop.f32.mrf.mxu0
    %v1345 = vadd.f32 0.0, %v1344
    %1346 = vdwg.mxu0
    %1347 = vmatpush.msra.mxu0 %v717
    %1348 = vmatpush.msra.mxu0 %v713
    %1349 = vmatpush.msra.mxu0 %v709
    %1350 = vmatpush.msra.mxu0 %v705
    %1351 = vmatpush.msra.mxu0 %v701
    %1352 = vmatpush.msra.mxu0 %v697
    %1353 = vmatpush.msra.mxu0 %v693
    %1354 = vmatpush.msra.mxu0 %v689
    %1355 = vmatpush.msra.mxu0 %v685
    %1356 = vmatpush.msra.mxu0 %v681
    %1357 = vmatpush.msra.mxu0 %v677
    %1358 = vmatpush.msra.mxu0 %v673
    %1359 = vmatpush.msra.mxu0 %v669
    %1360 = vmatpush.msra.mxu0 %v665
    %1361 = vmatpush.msra.mxu0 %v661
    %1362 = vmatpush.msra.mxu0 %v657
    %1363 = vmatmul.f32.gmra.mxu0 %v1306
    %v1364 = vpop.f32.mrf.mxu0
    %v1365 = vadd.f32 0.0, %v1364
    %1366 = vdwg.mxu0
    %1367 = vmatpush.msra.mxu0 %v718
    %1368 = vmatpush.msra.mxu0 %v714
    %1369 = vmatpush.msra.mxu0 %v710
    %1370 = vmatpush.msra.mxu0 %v706
    %1371 = vmatpush.msra.mxu0 %v702
    %1372 = vmatpush.msra.mxu0 %v698
    %1373 = vmatpush.msra.mxu0 %v694
    %1374 = vmatpush.msra.mxu0 %v690
    %1375 = vmatpush.msra.mxu0 %v686
    %1376 = vmatpush.msra.mxu0 %v682
    %1377 = vmatpush.msra.mxu0 %v678
    %1378 = vmatpush.msra.mxu0 %v674
    %1379 = vmatpush.msra.mxu0 %v670
    %1380 = vmatpush.msra.mxu0 %v666
    %1381 = vmatpush.msra.mxu0 %v662
    %1382 = vmatpush.msra.mxu0 %v658
    %1383 = vmatmul.f32.gmra.mxu0 %v1306
    %v1384 = vpop.f32.mrf.mxu0
    %v1385 = vadd.f32 0.0, %v1384
    %1386 = vdwg.mxu0
    %v1387 = vadd.f32 %v363, %v1325
    %v1388 = vadd.f32 %v404, %v1345
    %v1389 = vadd.f32 %v445, %v1365
    %v1390 = vadd.f32 %v486, %v1385
    %v1391 = vxor.u32 %v1387, 2147483648
    %v1392 = vxor.u32 %v1388, 2147483648
    %v1393 = vmul.f32 %v1391, 1.442695
    %v1394 = vpow.pop %v1393
    %v1395 = vmul.f32 %v1392, 1.442695
    %v1396 = vpow.pop %v1395
    %v1397 = vadd.f32 %v1394, 1.0
    %v1398 = vadd.f32 %v1396, 1.0
    %v1399 = vrcp.pop %v1397
    %v1400 = vmul.f32 %v1397, %v1399
    %v1401 = vsub.f32 1.0, %v1400
    %v1402 = vmul.f32 %v1399, %v1401
    %v1403 = vadd.f32 %v1399, %v1402
    %vm1404 = vweird.f32 %v1397
    %vm1405 = vweird.f32 %v1399
    %vm1406 = vmor %vm1404, %vm1405
    %v1407 = vsel %vm1406, %v1399, %v1403
    %v1408 = vand.u32 2147483647, %v1397
    %vm1409 = vcmp.eq.f32.partialorder %v1408, 8.507059e+37
    %v1410 = vand.u32 %v1397, 2147483648
    %v1411 = vor.u32 1.1754944e-38, %v1410
    %v1412 = vsel %vm1409, %v1411, %v1407
    %v1413 = vmul.f32 1.0, %v1412
    %v1414 = vrcp.pop %v1398
    %v1415 = vmul.f32 %v1398, %v1414
    %v1416 = vsub.f32 1.0, %v1415
    %v1417 = vmul.f32 %v1414, %v1416
    %v1418 = vadd.f32 %v1414, %v1417
    %vm1419 = vweird.f32 %v1398
    %vm1420 = vweird.f32 %v1414
    %vm1421 = vmor %vm1419, %vm1420
    %v1422 = vsel %vm1421, %v1414, %v1418
    %v1423 = vand.u32 2147483647, %v1398
    %vm1424 = vcmp.eq.f32.partialorder %v1423, 8.507059e+37
    %v1425 = vand.u32 %v1398, 2147483648
    %v1426 = vor.u32 1.1754944e-38, %v1425
    %v1427 = vsel %vm1424, %v1426, %v1422
    %v1428 = vmul.f32 1.0, %v1427
    %v1429 = vtanh.pop %v1389
    %v1430 = vxor.u32 %v1390, 2147483648
    %v1431 = vmul.f32 %v1430, 1.442695
    %v1432 = vpow.pop %v1431
    %v1433 = vadd.f32 %v1432, 1.0
    %v1434 = vrcp.pop %v1433
    %v1435 = vmul.f32 %v1433, %v1434
    %v1436 = vsub.f32 1.0, %v1435
    %v1437 = vmul.f32 %v1434, %v1436
    %v1438 = vadd.f32 %v1434, %v1437
    %vm1439 = vweird.f32 %v1433
    %vm1440 = vweird.f32 %v1434
    %vm1441 = vmor %vm1439, %vm1440
    %v1442 = vsel %vm1441, %v1434, %v1438
    %v1443 = vand.u32 2147483647, %v1433
    %vm1444 = vcmp.eq.f32.partialorder %v1443, 8.507059e+37
    %v1445 = vand.u32 %v1433, 2147483648
    %v1446 = vor.u32 1.1754944e-38, %v1445
    %v1447 = vsel %vm1444, %v1446, %v1442
    %v1448 = vmul.f32 1.0, %v1447
    %v1449 = vmul.f32 %v1428, %v1304
    %v1450 = vmul.f32 %v1413, %v1429
    %v1451 = vadd.f32 %v1449, %v1450
    %v1452 = vtanh.pop %v1451
    %v1453 = vmul.f32 %v1448, %v1452
    %1454 = vmatpush.msra.mxu0 %v715
    %1455 = vmatpush.msra.mxu0 %v711
    %1456 = vmatpush.msra.mxu0 %v707
    %1457 = vmatpush.msra.mxu0 %v703
    %1458 = vmatpush.msra.mxu0 %v699
    %1459 = vmatpush.msra.mxu0 %v695
    %1460 = vmatpush.msra.mxu0 %v691
    %1461 = vmatpush.msra.mxu0 %v687
    %1462 = vmatpush.msra.mxu0 %v683
    %1463 = vmatpush.msra.mxu0 %v679
    %1464 = vmatpush.msra.mxu0 %v675
    %1465 = vmatpush.msra.mxu0 %v671
    %1466 = vmatpush.msra.mxu0 %v667
    %1467 = vmatpush.msra.mxu0 %v663
    %1468 = vmatpush.msra.mxu0 %v659
    %1469 = vmatpush.msra.mxu0 %v655
    %1470 = vmatmul.f32.gmra.mxu0 %v1453
    %v1471 = vpop.f32.mrf.mxu0
    %v1472 = vadd.f32 0.0, %v1471
    %1473 = vdwg.mxu0
    %1474 = vmatpush.msra.mxu0 %v716
    %1475 = vmatpush.msra.mxu0 %v712
    %1476 = vmatpush.msra.mxu0 %v708
    %1477 = vmatpush.msra.mxu0 %v704
    %1478 = vmatpush.msra.mxu0 %v700
    %1479 = vmatpush.msra.mxu0 %v696
    %1480 = vmatpush.msra.mxu0 %v692
    %1481 = vmatpush.msra.mxu0 %v688
    %1482 = vmatpush.msra.mxu0 %v684
    %1483 = vmatpush.msra.mxu0 %v680
    %1484 = vmatpush.msra.mxu0 %v676
    %1485 = vmatpush.msra.mxu0 %v672
    %1486 = vmatpush.msra.mxu0 %v668
    %1487 = vmatpush.msra.mxu0 %v664
    %1488 = vmatpush.msra.mxu0 %v660
    %1489 = vmatpush.msra.mxu0 %v656
    %1490 = vmatmul.f32.gmra.mxu0 %v1453
    %v1491 = vpop.f32.mrf.mxu0
    %v1492 = vadd.f32 0.0, %v1491
    %1493 = vdwg.mxu0
    %1494 = vmatpush.msra.mxu0 %v717
    %1495 = vmatpush.msra.mxu0 %v713
    %1496 = vmatpush.msra.mxu0 %v709
    %1497 = vmatpush.msra.mxu0 %v705
    %1498 = vmatpush.msra.mxu0 %v701
    %1499 = vmatpush.msra.mxu0 %v697
    %1500 = vmatpush.msra.mxu0 %v693
    %1501 = vmatpush.msra.mxu0 %v689
    %1502 = vmatpush.msra.mxu0 %v685
    %1503 = vmatpush.msra.mxu0 %v681
    %1504 = vmatpush.msra.mxu0 %v677
    %1505 = vmatpush.msra.mxu0 %v673
    %1506 = vmatpush.msra.mxu0 %v669
    %1507 = vmatpush.msra.mxu0 %v665
    %1508 = vmatpush.msra.mxu0 %v661
    %1509 = vmatpush.msra.mxu0 %v657
    %1510 = vmatmul.f32.gmra.mxu0 %v1453
    %v1511 = vpop.f32.mrf.mxu0
    %v1512 = vadd.f32 0.0, %v1511
    %1513 = vdwg.mxu0
    %1514 = vmatpush.msra.mxu0 %v718
    %1515 = vmatpush.msra.mxu0 %v714
    %1516 = vmatpush.msra.mxu0 %v710
    %1517 = vmatpush.msra.mxu0 %v706
    %1518 = vmatpush.msra.mxu0 %v702
    %1519 = vmatpush.msra.mxu0 %v698
    %1520 = vmatpush.msra.mxu0 %v694
    %1521 = vmatpush.msra.mxu0 %v690
    %1522 = vmatpush.msra.mxu0 %v686
    %1523 = vmatpush.msra.mxu0 %v682
    %1524 = vmatpush.msra.mxu0 %v678
    %1525 = vmatpush.msra.mxu0 %v674
    %1526 = vmatpush.msra.mxu0 %v670
    %1527 = vmatpush.msra.mxu0 %v666
    %1528 = vmatpush.msra.mxu0 %v662
    %1529 = vmatpush.msra.mxu0 %v658
    %1530 = vmatmul.f32.gmra.mxu0 %v1453
    %v1531 = vpop.f32.mrf.mxu0
    %v1532 = vadd.f32 0.0, %v1531
    %1533 = vdwg.mxu0
    %v1534 = vadd.f32 %v366, %v1472
    %v1535 = vadd.f32 %v407, %v1492
    %v1536 = vadd.f32 %v448, %v1512
    %v1537 = vadd.f32 %v489, %v1532
    %v1538 = vxor.u32 %v1534, 2147483648
    %v1539 = vxor.u32 %v1535, 2147483648
    %v1540 = vmul.f32 %v1538, 1.442695
    %v1541 = vpow.pop %v1540
    %v1542 = vmul.f32 %v1539, 1.442695
    %v1543 = vpow.pop %v1542
    %v1544 = vadd.f32 %v1541, 1.0
    %v1545 = vadd.f32 %v1543, 1.0
    %v1546 = vrcp.pop %v1544
    %v1547 = vmul.f32 %v1544, %v1546
    %v1548 = vsub.f32 1.0, %v1547
    %v1549 = vmul.f32 %v1546, %v1548
    %v1550 = vadd.f32 %v1546, %v1549
    %vm1551 = vweird.f32 %v1544
    %vm1552 = vweird.f32 %v1546
    %vm1553 = vmor %vm1551, %vm1552
    %v1554 = vsel %vm1553, %v1546, %v1550
    %v1555 = vand.u32 2147483647, %v1544
    %vm1556 = vcmp.eq.f32.partialorder %v1555, 8.507059e+37
    %v1557 = vand.u32 %v1544, 2147483648
    %v1558 = vor.u32 1.1754944e-38, %v1557
    %v1559 = vsel %vm1556, %v1558, %v1554
    %v1560 = vmul.f32 1.0, %v1559
    %v1561 = vrcp.pop %v1545
    %v1562 = vmul.f32 %v1545, %v1561
    %v1563 = vsub.f32 1.0, %v1562
    %v1564 = vmul.f32 %v1561, %v1563
    %v1565 = vadd.f32 %v1561, %v1564
    %vm1566 = vweird.f32 %v1545
    %vm1567 = vweird.f32 %v1561
    %vm1568 = vmor %vm1566, %vm1567
    %v1569 = vsel %vm1568, %v1561, %v1565
    %v1570 = vand.u32 2147483647, %v1545
    %vm1571 = vcmp.eq.f32.partialorder %v1570, 8.507059e+37
    %v1572 = vand.u32 %v1545, 2147483648
    %v1573 = vor.u32 1.1754944e-38, %v1572
    %v1574 = vsel %vm1571, %v1573, %v1569
    %v1575 = vmul.f32 1.0, %v1574
    %v1576 = vtanh.pop %v1536
    %v1577 = vxor.u32 %v1537, 2147483648
    %v1578 = vmul.f32 %v1577, 1.442695
    %v1579 = vpow.pop %v1578
    %v1580 = vadd.f32 %v1579, 1.0
    %v1581 = vrcp.pop %v1580
    %v1582 = vmul.f32 %v1580, %v1581
    %v1583 = vsub.f32 1.0, %v1582
    %v1584 = vmul.f32 %v1581, %v1583
    %v1585 = vadd.f32 %v1581, %v1584
    %vm1586 = vweird.f32 %v1580
    %vm1587 = vweird.f32 %v1581
    %vm1588 = vmor %vm1586, %vm1587
    %v1589 = vsel %vm1588, %v1581, %v1585
    %v1590 = vand.u32 2147483647, %v1580
    %vm1591 = vcmp.eq.f32.partialorder %v1590, 8.507059e+37
    %v1592 = vand.u32 %v1580, 2147483648
    %v1593 = vor.u32 1.1754944e-38, %v1592
    %v1594 = vsel %vm1591, %v1593, %v1589
    %v1595 = vmul.f32 1.0, %v1594
    %v1596 = vmul.f32 %v1575, %v1451
    %v1597 = vmul.f32 %v1560, %v1576
    %v1598 = vadd.f32 %v1596, %v1597
    %v1599 = vtanh.pop %v1598
    %v1600 = vmul.f32 %v1595, %v1599
    %1601 = vmatpush.msra.mxu0 %v715
    %1602 = vmatpush.msra.mxu0 %v711
    %1603 = vmatpush.msra.mxu0 %v707
    %1604 = vmatpush.msra.mxu0 %v703
    %1605 = vmatpush.msra.mxu0 %v699
    %1606 = vmatpush.msra.mxu0 %v695
    %1607 = vmatpush.msra.mxu0 %v691
    %1608 = vmatpush.msra.mxu0 %v687
    %1609 = vmatpush.msra.mxu0 %v683
    %1610 = vmatpush.msra.mxu0 %v679
    %1611 = vmatpush.msra.mxu0 %v675
    %1612 = vmatpush.msra.mxu0 %v671
    %1613 = vmatpush.msra.mxu0 %v667
    %1614 = vmatpush.msra.mxu0 %v663
    %1615 = vmatpush.msra.mxu0 %v659
    %1616 = vmatpush.msra.mxu0 %v655
    %1617 = vmatmul.f32.gmra.mxu0 %v1600
    %v1618 = vpop.f32.mrf.mxu0
    %v1619 = vadd.f32 0.0, %v1618
    %1620 = vdwg.mxu0
    %1621 = vmatpush.msra.mxu0 %v716
    %1622 = vmatpush.msra.mxu0 %v712
    %1623 = vmatpush.msra.mxu0 %v708
    %1624 = vmatpush.msra.mxu0 %v704
    %1625 = vmatpush.msra.mxu0 %v700
    %1626 = vmatpush.msra.mxu0 %v696
    %1627 = vmatpush.msra.mxu0 %v692
    %1628 = vmatpush.msra.mxu0 %v688
    %1629 = vmatpush.msra.mxu0 %v684
    %1630 = vmatpush.msra.mxu0 %v680
    %1631 = vmatpush.msra.mxu0 %v676
    %1632 = vmatpush.msra.mxu0 %v672
    %1633 = vmatpush.msra.mxu0 %v668
    %1634 = vmatpush.msra.mxu0 %v664
    %1635 = vmatpush.msra.mxu0 %v660
    %1636 = vmatpush.msra.mxu0 %v656
    %1637 = vmatmul.f32.gmra.mxu0 %v1600
    %v1638 = vpop.f32.mrf.mxu0
    %v1639 = vadd.f32 0.0, %v1638
    %1640 = vdwg.mxu0
    %1641 = vmatpush.msra.mxu0 %v717
    %1642 = vmatpush.msra.mxu0 %v713
    %1643 = vmatpush.msra.mxu0 %v709
    %1644 = vmatpush.msra.mxu0 %v705
    %1645 = vmatpush.msra.mxu0 %v701
    %1646 = vmatpush.msra.mxu0 %v697
    %1647 = vmatpush.msra.mxu0 %v693
    %1648 = vmatpush.msra.mxu0 %v689
    %1649 = vmatpush.msra.mxu0 %v685
    %1650 = vmatpush.msra.mxu0 %v681
    %1651 = vmatpush.msra.mxu0 %v677
    %1652 = vmatpush.msra.mxu0 %v673
    %1653 = vmatpush.msra.mxu0 %v669
    %1654 = vmatpush.msra.mxu0 %v665
    %1655 = vmatpush.msra.mxu0 %v661
    %1656 = vmatpush.msra.mxu0 %v657
    %1657 = vmatmul.f32.gmra.mxu0 %v1600
    %v1658 = vpop.f32.mrf.mxu0
    %v1659 = vadd.f32 0.0, %v1658
    %1660 = vdwg.mxu0
    %1661 = vmatpush.msra.mxu0 %v718
    %1662 = vmatpush.msra.mxu0 %v714
    %1663 = vmatpush.msra.mxu0 %v710
    %1664 = vmatpush.msra.mxu0 %v706
    %1665 = vmatpush.msra.mxu0 %v702
    %1666 = vmatpush.msra.mxu0 %v698
    %1667 = vmatpush.msra.mxu0 %v694
    %1668 = vmatpush.msra.mxu0 %v690
    %1669 = vmatpush.msra.mxu0 %v686
    %1670 = vmatpush.msra.mxu0 %v682
    %1671 = vmatpush.msra.mxu0 %v678
    %1672 = vmatpush.msra.mxu0 %v674
    %1673 = vmatpush.msra.mxu0 %v670
    %1674 = vmatpush.msra.mxu0 %v666
    %1675 = vmatpush.msra.mxu0 %v662
    %1676 = vmatpush.msra.mxu0 %v658
    %1677 = vmatmul.f32.gmra.mxu0 %v1600
    %v1678 = vpop.f32.mrf.mxu0
    %v1679 = vadd.f32 0.0, %v1678
    %1680 = vdwg.mxu0
    %v1681 = vadd.f32 %v369, %v1619
    %v1682 = vadd.f32 %v410, %v1639
    %v1683 = vadd.f32 %v451, %v1659
    %v1684 = vadd.f32 %v492, %v1679
    %v1685 = vxor.u32 %v1681, 2147483648
    %v1686 = vxor.u32 %v1682, 2147483648
    %v1687 = vmul.f32 %v1685, 1.442695
    %v1688 = vpow.pop %v1687
    %v1689 = vmul.f32 %v1686, 1.442695
    %v1690 = vpow.pop %v1689
    %v1691 = vadd.f32 %v1688, 1.0
    %v1692 = vadd.f32 %v1690, 1.0
    %v1693 = vrcp.pop %v1691
    %v1694 = vmul.f32 %v1691, %v1693
    %v1695 = vsub.f32 1.0, %v1694
    %v1696 = vmul.f32 %v1693, %v1695
    %v1697 = vadd.f32 %v1693, %v1696
    %vm1698 = vweird.f32 %v1691
    %vm1699 = vweird.f32 %v1693
    %vm1700 = vmor %vm1698, %vm1699
    %v1701 = vsel %vm1700, %v1693, %v1697
    %v1702 = vand.u32 2147483647, %v1691
    %vm1703 = vcmp.eq.f32.partialorder %v1702, 8.507059e+37
    %v1704 = vand.u32 %v1691, 2147483648
    %v1705 = vor.u32 1.1754944e-38, %v1704
    %v1706 = vsel %vm1703, %v1705, %v1701
    %v1707 = vmul.f32 1.0, %v1706
    %v1708 = vrcp.pop %v1692
    %v1709 = vmul.f32 %v1692, %v1708
    %v1710 = vsub.f32 1.0, %v1709
    %v1711 = vmul.f32 %v1708, %v1710
    %v1712 = vadd.f32 %v1708, %v1711
    %vm1713 = vweird.f32 %v1692
    %vm1714 = vweird.f32 %v1708
    %vm1715 = vmor %vm1713, %vm1714
    %v1716 = vsel %vm1715, %v1708, %v1712
    %v1717 = vand.u32 2147483647, %v1692
    %vm1718 = vcmp.eq.f32.partialorder %v1717, 8.507059e+37
    %v1719 = vand.u32 %v1692, 2147483648
    %v1720 = vor.u32 1.1754944e-38, %v1719
    %v1721 = vsel %vm1718, %v1720, %v1716
    %v1722 = vmul.f32 1.0, %v1721
    %v1723 = vtanh.pop %v1683
    %v1724 = vxor.u32 %v1684, 2147483648
    %v1725 = vmul.f32 %v1724, 1.442695
    %v1726 = vpow.pop %v1725
    %v1727 = vadd.f32 %v1726, 1.0
    %v1728 = vrcp.pop %v1727
    %v1729 = vmul.f32 %v1727, %v1728
    %v1730 = vsub.f32 1.0, %v1729
    %v1731 = vmul.f32 %v1728, %v1730
    %v1732 = vadd.f32 %v1728, %v1731
    %vm1733 = vweird.f32 %v1727
    %vm1734 = vweird.f32 %v1728
    %vm1735 = vmor %vm1733, %vm1734
    %v1736 = vsel %vm1735, %v1728, %v1732
    %v1737 = vand.u32 2147483647, %v1727
    %vm1738 = vcmp.eq.f32.partialorder %v1737, 8.507059e+37
    %v1739 = vand.u32 %v1727, 2147483648
    %v1740 = vor.u32 1.1754944e-38, %v1739
    %v1741 = vsel %vm1738, %v1740, %v1736
    %v1742 = vmul.f32 1.0, %v1741
    %v1743 = vmul.f32 %v1722, %v1598
    %v1744 = vmul.f32 %v1707, %v1723
    %v1745 = vadd.f32 %v1743, %v1744
    %v1746 = vtanh.pop %v1745
    %v1747 = vmul.f32 %v1742, %v1746
    %1748 = vmatpush.msra.mxu0 %v715
    %1749 = vmatpush.msra.mxu0 %v711
    %1750 = vmatpush.msra.mxu0 %v707
    %1751 = vmatpush.msra.mxu0 %v703
    %1752 = vmatpush.msra.mxu0 %v699
    %1753 = vmatpush.msra.mxu0 %v695
    %1754 = vmatpush.msra.mxu0 %v691
    %1755 = vmatpush.msra.mxu0 %v687
    %1756 = vmatpush.msra.mxu0 %v683
    %1757 = vmatpush.msra.mxu0 %v679
    %1758 = vmatpush.msra.mxu0 %v675
    %1759 = vmatpush.msra.mxu0 %v671
    %1760 = vmatpush.msra.mxu0 %v667
    %1761 = vmatpush.msra.mxu0 %v663
    %1762 = vmatpush.msra.mxu0 %v659
    %1763 = vmatpush.msra.mxu0 %v655
    %1764 = vmatmul.f32.gmra.mxu0 %v1747
    %v1765 = vpop.f32.mrf.mxu0
    %v1766 = vadd.f32 0.0, %v1765
    %1767 = vdwg.mxu0
    %1768 = vmatpush.msra.mxu0 %v716
    %1769 = vmatpush.msra.mxu0 %v712
    %1770 = vmatpush.msra.mxu0 %v708
    %1771 = vmatpush.msra.mxu0 %v704
    %1772 = vmatpush.msra.mxu0 %v700
    %1773 = vmatpush.msra.mxu0 %v696
    %1774 = vmatpush.msra.mxu0 %v692
    %1775 = vmatpush.msra.mxu0 %v688
    %1776 = vmatpush.msra.mxu0 %v684
    %1777 = vmatpush.msra.mxu0 %v680
    %1778 = vmatpush.msra.mxu0 %v676
    %1779 = vmatpush.msra.mxu0 %v672
    %1780 = vmatpush.msra.mxu0 %v668
    %1781 = vmatpush.msra.mxu0 %v664
    %1782 = vmatpush.msra.mxu0 %v660
    %1783 = vmatpush.msra.mxu0 %v656
    %1784 = vmatmul.f32.gmra.mxu0 %v1747
    %v1785 = vpop.f32.mrf.mxu0
    %v1786 = vadd.f32 0.0, %v1785
    %1787 = vdwg.mxu0
    %1788 = vmatpush.msra.mxu0 %v717
    %1789 = vmatpush.msra.mxu0 %v713
    %1790 = vmatpush.msra.mxu0 %v709
    %1791 = vmatpush.msra.mxu0 %v705
    %1792 = vmatpush.msra.mxu0 %v701
    %1793 = vmatpush.msra.mxu0 %v697
    %1794 = vmatpush.msra.mxu0 %v693
    %1795 = vmatpush.msra.mxu0 %v689
    %1796 = vmatpush.msra.mxu0 %v685
    %1797 = vmatpush.msra.mxu0 %v681
    %1798 = vmatpush.msra.mxu0 %v677
    %1799 = vmatpush.msra.mxu0 %v673
    %1800 = vmatpush.msra.mxu0 %v669
    %1801 = vmatpush.msra.mxu0 %v665
    %1802 = vmatpush.msra.mxu0 %v661
    %1803 = vmatpush.msra.mxu0 %v657
    %1804 = vmatmul.f32.gmra.mxu0 %v1747
    %v1805 = vpop.f32.mrf.mxu0
    %v1806 = vadd.f32 0.0, %v1805
    %1807 = vdwg.mxu0
    %1808 = vmatpush.msra.mxu0 %v718
    %1809 = vmatpush.msra.mxu0 %v714
    %1810 = vmatpush.msra.mxu0 %v710
    %1811 = vmatpush.msra.mxu0 %v706
    %1812 = vmatpush.msra.mxu0 %v702
    %1813 = vmatpush.msra.mxu0 %v698
    %1814 = vmatpush.msra.mxu0 %v694
    %1815 = vmatpush.msra.mxu0 %v690
    %1816 = vmatpush.msra.mxu0 %v686
    %1817 = vmatpush.msra.mxu0 %v682
    %1818 = vmatpush.msra.mxu0 %v678
    %1819 = vmatpush.msra.mxu0 %v674
    %1820 = vmatpush.msra.mxu0 %v670
    %1821 = vmatpush.msra.mxu0 %v666
    %1822 = vmatpush.msra.mxu0 %v662
    %1823 = vmatpush.msra.mxu0 %v658
    %1824 = vmatmul.f32.gmra.mxu0 %v1747
    %v1825 = vpop.f32.mrf.mxu0
    %v1826 = vadd.f32 0.0, %v1825
    %1827 = vdwg.mxu0
    %v1828 = vadd.f32 %v372, %v1766
    %v1829 = vadd.f32 %v413, %v1786
    %v1830 = vadd.f32 %v454, %v1806
    %v1831 = vadd.f32 %v495, %v1826
    %v1832 = vxor.u32 %v1828, 2147483648
    %v1833 = vxor.u32 %v1829, 2147483648
    %v1834 = vmul.f32 %v1832, 1.442695
    %v1835 = vpow.pop %v1834
    %v1836 = vmul.f32 %v1833, 1.442695
    %v1837 = vpow.pop %v1836
    %v1838 = vadd.f32 %v1835, 1.0
    %v1839 = vadd.f32 %v1837, 1.0
    %v1840 = vrcp.pop %v1838
    %v1841 = vmul.f32 %v1838, %v1840
    %v1842 = vsub.f32 1.0, %v1841
    %v1843 = vmul.f32 %v1840, %v1842
    %v1844 = vadd.f32 %v1840, %v1843
    %vm1845 = vweird.f32 %v1838
    %vm1846 = vweird.f32 %v1840
    %vm1847 = vmor %vm1845, %vm1846
    %v1848 = vsel %vm1847, %v1840, %v1844
    %v1849 = vand.u32 2147483647, %v1838
    %vm1850 = vcmp.eq.f32.partialorder %v1849, 8.507059e+37
    %v1851 = vand.u32 %v1838, 2147483648
    %v1852 = vor.u32 1.1754944e-38, %v1851
    %v1853 = vsel %vm1850, %v1852, %v1848
    %v1854 = vmul.f32 1.0, %v1853
    %v1855 = vrcp.pop %v1839
    %v1856 = vmul.f32 %v1839, %v1855
    %v1857 = vsub.f32 1.0, %v1856
    %v1858 = vmul.f32 %v1855, %v1857
    %v1859 = vadd.f32 %v1855, %v1858
    %vm1860 = vweird.f32 %v1839
    %vm1861 = vweird.f32 %v1855
    %vm1862 = vmor %vm1860, %vm1861
    %v1863 = vsel %vm1862, %v1855, %v1859
    %v1864 = vand.u32 2147483647, %v1839
    %vm1865 = vcmp.eq.f32.partialorder %v1864, 8.507059e+37
    %v1866 = vand.u32 %v1839, 2147483648
    %v1867 = vor.u32 1.1754944e-38, %v1866
    %v1868 = vsel %vm1865, %v1867, %v1863
    %v1869 = vmul.f32 1.0, %v1868
    %v1870 = vtanh.pop %v1830
    %v1871 = vxor.u32 %v1831, 2147483648
    %v1872 = vmul.f32 %v1871, 1.442695
    %v1873 = vpow.pop %v1872
    %v1874 = vadd.f32 %v1873, 1.0
    %v1875 = vrcp.pop %v1874
    %v1876 = vmul.f32 %v1874, %v1875
    %v1877 = vsub.f32 1.0, %v1876
    %v1878 = vmul.f32 %v1875, %v1877
    %v1879 = vadd.f32 %v1875, %v1878
    %vm1880 = vweird.f32 %v1874
    %vm1881 = vweird.f32 %v1875
    %vm1882 = vmor %vm1880, %vm1881
    %v1883 = vsel %vm1882, %v1875, %v1879
    %v1884 = vand.u32 2147483647, %v1874
    %vm1885 = vcmp.eq.f32.partialorder %v1884, 8.507059e+37
    %v1886 = vand.u32 %v1874, 2147483648
    %v1887 = vor.u32 1.1754944e-38, %v1886
    %v1888 = vsel %vm1885, %v1887, %v1883
    %v1889 = vmul.f32 1.0, %v1888
    %v1890 = vmul.f32 %v1869, %v1745
    %v1891 = vmul.f32 %v1854, %v1870
    %v1892 = vadd.f32 %v1890, %v1891
    %v1893 = vtanh.pop %v1892
    %v1894 = vmul.f32 %v1889, %v1893
    %v1895 = vld [vmem:[#allocation7] sm:$0xff]
    %v1896 = vld [vmem:[#allocation7 + $0x8] sm:$0xff]
    %v1897 = vld [vmem:[#allocation7 + $0x10] sm:$0xff]
    %v1898 = vld [vmem:[#allocation7 + $0x18] sm:$0xff]
    %v1899 = vld [vmem:[#allocation7 + $0x20] sm:$0xff]
    %v1900 = vld [vmem:[#allocation7 + $0x28] sm:$0xff]
    %v1901 = vld [vmem:[#allocation7 + $0x30] sm:$0xff]
    %v1902 = vld [vmem:[#allocation7 + $0x38] sm:$0xff]
    %v1903 = vld [vmem:[#allocation7 + $0x40] sm:$0xff]
    %v1904 = vld [vmem:[#allocation7 + $0x48] sm:$0xff]
    %v1905 = vld [vmem:[#allocation7 + $0x50] sm:$0xff]
    %v1906 = vld [vmem:[#allocation7 + $0x58] sm:$0xff]
    %v1907 = vld [vmem:[#allocation7 + $0x60] sm:$0xff]
    %v1908 = vld [vmem:[#allocation7 + $0x68] sm:$0xff]
    %v1909 = vld [vmem:[#allocation7 + $0x70] sm:$0xff]
    %v1910 = vld [vmem:[#allocation7 + $0x78] sm:$0xff]
    %1911 = vmatpush.msra.mxu0 %v1910
    %1912 = vmatpush.msra.mxu0 %v1909
    %1913 = vmatpush.msra.mxu0 %v1908
    %1914 = vmatpush.msra.mxu0 %v1907
    %1915 = vmatpush.msra.mxu0 %v1906
    %1916 = vmatpush.msra.mxu0 %v1905
    %1917 = vmatpush.msra.mxu0 %v1904
    %1918 = vmatpush.msra.mxu0 %v1903
    %1919 = vmatpush.msra.mxu0 %v1902
    %1920 = vmatpush.msra.mxu0 %v1901
    %1921 = vmatpush.msra.mxu0 %v1900
    %1922 = vmatpush.msra.mxu0 %v1899
    %1923 = vmatpush.msra.mxu0 %v1898
    %1924 = vmatpush.msra.mxu0 %v1897
    %1925 = vmatpush.msra.mxu0 %v1896
    %1926 = vmatpush.msra.mxu0 %v1895
    %1927 = vmatmul.f32.gmra.mxu0 %v1894
    %v1928 = vpop.f32.mrf.mxu0
    %v1929 = vadd.f32 %v653, %v1928
    %1930 = vdwg.mxu0
    %v1931 = vld [vmem:[%s11] sm:$0x1]
    %v1933 = vperm.slane %v1931, 0
    %v1935 = vadd.f32 %v1929, %v1933
    %v1936 = vmax.f32 %v1935, 0.0
    %v1937 = vld [vmem:[%s12] sm:$0xff]
    %v1938 = vld [vmem:[%s12 + $0x8] sm:$0xff]
    %v1939 = vld [vmem:[%s12 + $0x10] sm:$0xff]
    %v1940 = vld [vmem:[%s12 + $0x18] sm:$0xff]
    %v1941 = vld [vmem:[%s12 + $0x20] sm:$0xff]
    %v1942 = vld [vmem:[%s12 + $0x28] sm:$0xff]
    %v1943 = vld [vmem:[%s12 + $0x30] sm:$0xff]
    %v1944 = vld [vmem:[%s12 + $0x38] sm:$0xff]
    %v1945 = vld [vmem:[%s12 + $0x40] sm:$0xff]
    %v1946 = vld [vmem:[%s12 + $0x48] sm:$0xff]
    %v1947 = vld [vmem:[%s12 + $0x50] sm:$0xff]
    %v1948 = vld [vmem:[%s12 + $0x58] sm:$0xff]
    %v1949 = vld [vmem:[%s12 + $0x60] sm:$0xff]
    %v1950 = vld [vmem:[%s12 + $0x68] sm:$0xff]
    %v1951 = vld [vmem:[%s12 + $0x70] sm:$0xff]
    %v1952 = vld [vmem:[%s12 + $0x78] sm:$0xff]
    %v1953 = vld [vmem:[%s13] sm:$0x1]
    %v1955 = vperm.slane %v1953, 0
    %1957 = vmatpush.msra.mxu0 %v1952
    %1958 = vmatpush.msra.mxu0 %v1951
    %1959 = vmatpush.msra.mxu0 %v1950
    %1960 = vmatpush.msra.mxu0 %v1949
    %1961 = vmatpush.msra.mxu0 %v1948
    %1962 = vmatpush.msra.mxu0 %v1947
    %1963 = vmatpush.msra.mxu0 %v1946
    %1964 = vmatpush.msra.mxu0 %v1945
    %1965 = vmatpush.msra.mxu0 %v1944
    %1966 = vmatpush.msra.mxu0 %v1943
    %1967 = vmatpush.msra.mxu0 %v1942
    %1968 = vmatpush.msra.mxu0 %v1941
    %1969 = vmatpush.msra.mxu0 %v1940
    %1970 = vmatpush.msra.mxu0 %v1939
    %1971 = vmatpush.msra.mxu0 %v1938
    %1972 = vmatpush.msra.mxu0 %v1937
    %1973 = vmatmul.f32.gmra.mxu0 %v1936
    %v1974 = vpop.f32.mrf.mxu0
    %v1975 = vadd.f32 %v1955, %v1974
    %1976 = vdwg.mxu0
    %vm1977 = vcmask 48128
    %1978 = vst.msk [vmem:[#allocation10] sm:$0xff] %vm1977, %v1975
    // Predicated region
    $region74: #{tpu_custom_call.1} parent=1 // pred_check
      _
    $region75: #{tpu_custom_call.1} parent=1 // pred_check_branch
      %1980 = sbr.rel (0) target = $region77
    $region76: #{tpu_custom_call.1} parent=1 // pred_region
      %1982 = vsyncadd [#allocation4], 0
      %s1984 = sshll.u32 [#allocation10], 4
      %s1985 = int_to_ptr.vmem [resolvable:$true] %s1984
      %s1986 = sshll.u32 %s14, 4
      %s1987 = int_to_ptr.hbm [resolvable:$true] %s1986
      %1989 = dma.vmem_to_hbm [thread:$0]  %s1985, 128, %s1987, [#allocation4]
    $region77: #{tpu_custom_call.1} parent=1 // pred_fallthru
      _
    // Predicated region
    $region78: #{tpu_custom_call.1} parent=1 // pred_check
      _
    $region79: #{tpu_custom_call.1} parent=1 // pred_check_branch
      %1991 = sbr.rel (0) target = $region81
    $region80: #{tpu_custom_call.1} parent=1 // pred_region
      %1993 = dma.done [#allocation4], 128
    $region81: #{tpu_custom_call.1} parent=1 // pred_fallthru
      _
    %1994 = vsyncpa [#allocation3], 1
    %1995 = vsyncpa [#allocation6], 1
    %1996 = vsyncpa [#allocation9], 1
    %1997 = vsyncpa [#allocation4], 1

</llo_original>
